<compile_context>
chip_gen: v5e
topology: v5e:2x2
jax: 0.10.0
libtpu: 0.0.40
codegen_flags: <defaults>
</compile_context>

<pallas_src>
import jax
import jax.numpy as jnp
from jax.experimental import pallas as pl
from jax.experimental.pallas import tpu as pltpu

STATE_DIM = 24                    # BipedalWalker-v3 observation_space.shape[0]
ACTION_DIM = 4                    # BipedalWalker-v3 action_space.shape[0]
IN_DIM = STATE_DIM + ACTION_DIM   # 28
IN_PAD = 32                       # fused layer-1 K padded to 32
H1 = 400
H2 = 300
H1P = 512                         # 400 padded to lane multiple
H2P = 384                         # 300 padded to lane multiple


def _round_up(x, m):
    return ((x + m - 1) // m) * m


def _critic_kernel(xy_ref,
                   w14_ref, b14_ref,
                   w2_ref, b2_ref, w5_ref, b5_ref,
                   w3_ref, w6_ref, b36_ref,
                   q_ref):
    """Both Q heads for one batch block; writes a lane-dense (bm, 2) tile."""
    xy = xy_ref[...]                                        # (bm, 32) f32

    # ---- fused layer 1 for both heads: one K=32 bf16 MXU pass -> (bm, 1024)
    hg = jnp.dot(xy.astype(jnp.bfloat16), w14_ref[...],
                 preferred_element_type=jnp.float32) + b14_ref[...]
    hg = jnp.maximum(hg, 0.0)
    h = hg[:, :H1P]          # head-1 activations (lane-aligned split at 512)
    g = hg[:, H1P:]          # head-2 activations

    # ---- layer 2 per head: bf16 MXU operands, f32 accum / bias / ReLU ----
    h2 = jnp.maximum(
        jnp.dot(h.astype(jnp.bfloat16), w2_ref[...],
                preferred_element_type=jnp.float32) + b2_ref[...], 0.0)
    g2 = jnp.maximum(
        jnp.dot(g.astype(jnp.bfloat16), w5_ref[...],
                preferred_element_type=jnp.float32) + b5_ref[...], 0.0)

    # ---- layer 3: N=1 outputs as VPU multiply + XLU reduce (no MXU pass),
    #      all f32 so v5e's VPU never sees bf16 elementwise math ----
    q1 = jnp.sum(h2 * w3_ref[...].astype(jnp.float32), axis=-1, keepdims=True)
    q2 = jnp.sum(g2 * w6_ref[...].astype(jnp.float32), axis=-1, keepdims=True)

    # single lane-dense (bm, 2) store
    q_ref[...] = jnp.concatenate([q1, q2], axis=1) + b36_ref[...]


def critic_forward(x, y, packed):
    """x: (B, state_dim), y: (B, action_dim) -> (q1, q2) each (B, 1)."""
    B = x.shape[0]
    # batch block:
    #  * tiny B (rollout): round to bf16 sublane-pack multiple (16)
    #  * mid B: a single 128-row block
    #  * large B: guarantee >= 2 blocks (v7x dual-TC), cap bm at 512
    if B <= 32:
        bm = _round_up(max(B, 1), 16)
    elif B <= 128:
        bm = 128
    else:
        bm = min(512, _round_up(pl.cdiv(B, 2), 128))
    b_pad = _round_up(B, bm)

    # pack [x | y | zero-pad] into one (b_pad, 32) f32 input (no JAX concat of
    # separate kernel inputs; padding rows/cols are mathematically inert)
    xy = jnp.zeros((b_pad, IN_PAD), jnp.float32)
    xy = xy.at[:B, :STATE_DIM].set(x.astype(jnp.float32))
    xy = xy.at[:B, STATE_DIM:IN_DIM].set(y.astype(jnp.float32))

    grid = (b_pad // bm,)

    q = pl.pallas_call(
        _critic_kernel,
        out_shape=jax.ShapeDtypeStruct((b_pad, 2), jnp.float32),
        grid_spec=pltpu.PrefetchScalarGridSpec(
            num_scalar_prefetch=0,
            grid=grid,
            in_specs=[
                pl.BlockSpec((bm, IN_PAD), lambda i: (i, 0)),
                # weights / biases: constant index maps -> resident in VMEM
                pl.BlockSpec((IN_PAD, 2 * H1P), lambda i: (0, 0)),
                pl.BlockSpec((1, 2 * H1P), lambda i: (0, 0)),
                pl.BlockSpec((H1P, H2P), lambda i: (0, 0)),
                pl.BlockSpec((1, H2P), lambda i: (0, 0)),
                pl.BlockSpec((H1P, H2P), lambda i: (0, 0)),
                pl.BlockSpec((1, H2P), lambda i: (0, 0)),
                pl.BlockSpec((1, H2P), lambda i: (0, 0)),
                pl.BlockSpec((1, H2P), lambda i: (0, 0)),
                pl.BlockSpec((1, 2), lambda i: (0, 0)),
            ],
            out_specs=pl.BlockSpec((bm, 2), lambda i: (i, 0)),
        ),
        compiler_params=pltpu.CompilerParams(
            dimension_semantics=("parallel",)),
    )(xy,
      packed["w14"], packed["b14"],
      packed["w2"], packed["b2"], packed["w5"], packed["b5"],
      packed["w3"], packed["w6"], packed["b36"])

    return q[:B, 0:1], q[:B, 1:2]


def init_params(key):
    """Deterministic init mirroring nn.Linear default (U[-1/sqrt(fan_in), +])."""
    dims = [
        (IN_DIM, H1),  # l1
        (H1, H2),      # l2
        (H2, 1),       # l3
        (IN_DIM, H1),  # l4
        (H1, H2),      # l5
        (H2, 1),       # l6
    ]
    params = {}
    for i, (fan_in, fan_out) in enumerate(dims, start=1):
        key, kw, kb = jax.random.split(key, 3)
        bound = 1.0 / jnp.sqrt(float(fan_in))
        # stored as (in, out) == W.T relative to PyTorch's (out, in)
        params[f"w{i}"] = jax.random.uniform(
            kw, (fan_in, fan_out), jnp.float32, -bound, bound)
        params[f"b{i}"] = jax.random.uniform(
            kb, (1, fan_out), jnp.float32, -bound, bound)
    return params


def pack_params(p):
    """Pad to lane multiples, fuse heads' layer 1 (K padded to 32), bf16 weights."""
    def pad_w(w, rows, cols):
        return jnp.zeros((rows, cols), jnp.float32).at[:w.shape[0], :w.shape[1]].set(w)

    def pad_b(b, cols):
        return jnp.zeros((1, cols), jnp.float32).at[:, :b.shape[1]].set(b)

    w1 = pad_w(p["w1"], IN_PAD, H1P)
    w4 = pad_w(p["w4"], IN_PAD, H1P)
    w14 = jnp.concatenate([w1, w4], axis=1)               # (32, 2*H1P)
    b14 = jnp.concatenate([pad_b(p["b1"], H1P),
                           pad_b(p["b4"], H1P)], axis=1)  # (1, 2*H1P)

    w3_row = pad_b(p["w3"].T, H2P)                        # (1, H2P)
    w6_row = pad_b(p["w6"].T, H2P)                        # (1, H2P)
    b36 = jnp.concatenate([p["b3"], p["b6"]], axis=1)     # (1, 2)

    return {
        "w14": w14.astype(jnp.bfloat16),                  # (32, 2*H1P)
        "b14": b14,
        "w2": pad_w(p["w2"], H1P, H2P).astype(jnp.bfloat16),
        "b2": pad_b(p["b2"], H2P),
        "w5": pad_w(p["w5"], H1P, H2P).astype(jnp.bfloat16),
        "b5": pad_b(p["b5"], H2P),
        "w3": w3_row.astype(jnp.bfloat16),
        "w6": w6_row.astype(jnp.bfloat16),
        "b36": b36,
    }


def critic_reference(x, y, packed):
    """Pure-JAX reference using the same bf16-operand / f32-accum numerics."""
    B = x.shape[0]
    xy = jnp.zeros((B, IN_PAD), jnp.float32)
    xy = xy.at[:, :STATE_DIM].set(x.astype(jnp.float32))
    xy = xy.at[:, STATE_DIM:IN_DIM].set(y.astype(jnp.float32))

    hg = jnp.maximum(
        jnp.dot(xy.astype(jnp.bfloat16), packed["w14"],
                preferred_element_type=jnp.float32) + packed["b14"], 0.0)
    h, g = hg[:, :H1P], hg[:, H1P:]
    h2 = jnp.maximum(
        jnp.dot(h.astype(jnp.bfloat16), packed["w2"],
                preferred_element_type=jnp.float32) + packed["b2"], 0.0)
    g2 = jnp.maximum(
        jnp.dot(g.astype(jnp.bfloat16), packed["w5"],
                preferred_element_type=jnp.float32) + packed["b5"], 0.0)
    q1 = jnp.sum(h2 * packed["w3"].astype(jnp.float32), axis=-1, keepdims=True)
    q2 = jnp.sum(g2 * packed["w6"].astype(jnp.float32), axis=-1, keepdims=True)
    return q1 + packed["b36"][:, 0:1], q2 + packed["b36"][:, 1:2]


if __name__ == "__main__":
    key = jax.random.PRNGKey(0)
    kp, kx, ky, kx2, ky2 = jax.random.split(key, 5)

    raw = init_params(kp)
    packed = pack_params(raw)

    # --- tiny-batch (rollout/latency) path ---
    B = 8
    x = jax.random.normal(kx, (B, STATE_DIM), jnp.float32)
    y = jax.random.normal(ky, (B, ACTION_DIM), jnp.float32)
    q1, q2 = critic_forward(x, y, packed)
    q1 = jax.block_until_ready(q1)
    q2 = jax.block_until_ready(q2)
    r1, r2 = critic_reference(x, y, packed)
    assert q1.shape == (B, 1) and q2.shape == (B, 1)
    assert jnp.allclose(q1, r1, atol=2e-3, rtol=2e-3)
    assert jnp.allclose(q2, r2, atol=2e-3, rtol=2e-3)

    # --- multi-block path (exercises the grid / batch padding) ---
    B2 = 160
    x2 = jax.random.normal(kx2, (B2, STATE_DIM), jnp.float32)
    y2 = jax.random.normal(ky2, (B2, ACTION_DIM), jnp.float32)
    p1, p2 = critic_forward(x2, y2, packed)
    p1 = jax.block_until_ready(p1)
    p2 = jax.block_until_ready(p2)
    s1, s2 = critic_reference(x2, y2, packed)
    assert p1.shape == (B2, 1) and p2.shape == (B2, 1)
    assert jnp.allclose(p1, s1, atol=2e-3, rtol=2e-3)
    assert jnp.allclose(p2, s2, atol=2e-3, rtol=2e-3)

    print("KERNEL_OK")
</pallas_src>

<mosaic_0001>
module attributes {stable_mosaic.version = 11 : i64} {
  func.func @_critic_kernel(%arg0: i32, %arg1: memref<16x32xf32, #tpu.memory_space<vmem>>, %arg2: memref<32x1024xbf16, #tpu.memory_space<vmem>>, %arg3: memref<1x1024xf32, #tpu.memory_space<vmem>>, %arg4: memref<512x384xbf16, #tpu.memory_space<vmem>>, %arg5: memref<1x384xf32, #tpu.memory_space<vmem>>, %arg6: memref<512x384xbf16, #tpu.memory_space<vmem>>, %arg7: memref<1x384xf32, #tpu.memory_space<vmem>>, %arg8: memref<1x384xbf16, #tpu.memory_space<vmem>>, %arg9: memref<1x384xbf16, #tpu.memory_space<vmem>>, %arg10: memref<1x2xf32, #tpu.memory_space<vmem>>, %arg11: memref<16x2xf32, #tpu.memory_space<vmem>>) attributes {dimension_semantics = [#tpu.dimension_semantics<parallel>], iteration_bounds = array<i64: 1>, scalar_prefetch = 0 : i64, scratch_operands = 0 : i64, tpu.core_type = #tpu.core_type<tc>, window_params = [{transform_indices = @transform_0, window_bounds = array<i64: 16, 32>}, {pipeline_mode = #tpu.pipeline_mode<synchronous>, transform_indices = @transform_1, window_bounds = array<i64: 32, 1024>}, {pipeline_mode = #tpu.pipeline_mode<synchronous>, transform_indices = @transform_2, window_bounds = array<i64: 1, 1024>}, {pipeline_mode = #tpu.pipeline_mode<synchronous>, transform_indices = @transform_3, window_bounds = array<i64: 512, 384>}, {pipeline_mode = #tpu.pipeline_mode<synchronous>, transform_indices = @transform_4, window_bounds = array<i64: 1, 384>}, {pipeline_mode = #tpu.pipeline_mode<synchronous>, transform_indices = @transform_5, window_bounds = array<i64: 512, 384>}, {pipeline_mode = #tpu.pipeline_mode<synchronous>, transform_indices = @transform_6, window_bounds = array<i64: 1, 384>}, {pipeline_mode = #tpu.pipeline_mode<synchronous>, transform_indices = @transform_7, window_bounds = array<i64: 1, 384>}, {pipeline_mode = #tpu.pipeline_mode<synchronous>, transform_indices = @transform_8, window_bounds = array<i64: 1, 384>}, {pipeline_mode = #tpu.pipeline_mode<synchronous>, transform_indices = @transform_9, window_bounds = array<i64: 1, 2>}, {transform_indices = @transform_10, window_bounds = array<i64: 16, 2>}]} {
    %c0 = arith.constant 0 : index
    %c0_0 = arith.constant 0 : index
    %0 = vector.load %arg1[%c0, %c0_0] : memref<16x32xf32, #tpu.memory_space<vmem>>, vector<16x32xf32>
    %1 = arith.truncf %0 : vector<16x32xf32> to vector<16x32xbf16>
    %c0_1 = arith.constant 0 : index
    %c0_2 = arith.constant 0 : index
    %2 = vector.load %arg2[%c0_1, %c0_2] : memref<32x1024xbf16, #tpu.memory_space<vmem>>, vector<32x1024xbf16>
    %cst = arith.constant dense<0.000000e+00> : vector<16x1024xf32>
    %3 = tpu.matmul %1, %2, %cst {dimension_numbers = #tpu.dot_dimension_numbers<[1], [0], [0], [1], [0, 0, 1, 1], [], []>} : vector<16x32xbf16>, vector<32x1024xbf16>, vector<16x1024xf32> -> vector<16x1024xf32>
    %c0_3 = arith.constant 0 : index
    %c0_4 = arith.constant 0 : index
    %4 = vector.load %arg3[%c0_3, %c0_4] : memref<1x1024xf32, #tpu.memory_space<vmem>>, vector<1x1024xf32>
    %5 = vector.broadcast %4 : vector<1x1024xf32> to vector<16x1024xf32>
    %6 = arith.addf %3, %5 : vector<16x1024xf32>
    %cst_5 = arith.constant 0.000000e+00 : f32
    %7 = vector.broadcast %cst_5 : f32 to vector<16x1024xf32>
    %8 = arith.maximumf %6, %7 : vector<16x1024xf32>
    %9 = vector.extract_strided_slice %8 {offsets = [0, 0], sizes = [16, 512], strides = [1, 1]} : vector<16x1024xf32> to vector<16x512xf32>
    %10 = vector.extract_strided_slice %8 {offsets = [0, 512], sizes = [16, 512], strides = [1, 1]} : vector<16x1024xf32> to vector<16x512xf32>
    %11 = arith.truncf %9 : vector<16x512xf32> to vector<16x512xbf16>
    %c0_6 = arith.constant 0 : index
    %c0_7 = arith.constant 0 : index
    %12 = vector.load %arg4[%c0_6, %c0_7] : memref<512x384xbf16, #tpu.memory_space<vmem>>, vector<512x384xbf16>
    %cst_8 = arith.constant dense<0.000000e+00> : vector<16x384xf32>
    %13 = tpu.matmul %11, %12, %cst_8 {dimension_numbers = #tpu.dot_dimension_numbers<[1], [0], [0], [1], [0, 0, 1, 1], [], []>} : vector<16x512xbf16>, vector<512x384xbf16>, vector<16x384xf32> -> vector<16x384xf32>
    %c0_9 = arith.constant 0 : index
    %c0_10 = arith.constant 0 : index
    %14 = vector.load %arg5[%c0_9, %c0_10] : memref<1x384xf32, #tpu.memory_space<vmem>>, vector<1x384xf32>
    %15 = vector.broadcast %14 : vector<1x384xf32> to vector<16x384xf32>
    %16 = arith.addf %13, %15 : vector<16x384xf32>
    %cst_11 = arith.constant 0.000000e+00 : f32
    %17 = vector.broadcast %cst_11 : f32 to vector<16x384xf32>
    %18 = arith.maximumf %16, %17 : vector<16x384xf32>
    %19 = arith.truncf %10 : vector<16x512xf32> to vector<16x512xbf16>
    %c0_12 = arith.constant 0 : index
    %c0_13 = arith.constant 0 : index
    %20 = vector.load %arg6[%c0_12, %c0_13] : memref<512x384xbf16, #tpu.memory_space<vmem>>, vector<512x384xbf16>
    %cst_14 = arith.constant dense<0.000000e+00> : vector<16x384xf32>
    %21 = tpu.matmul %19, %20, %cst_14 {dimension_numbers = #tpu.dot_dimension_numbers<[1], [0], [0], [1], [0, 0, 1, 1], [], []>} : vector<16x512xbf16>, vector<512x384xbf16>, vector<16x384xf32> -> vector<16x384xf32>
    %c0_15 = arith.constant 0 : index
    %c0_16 = arith.constant 0 : index
    %22 = vector.load %arg7[%c0_15, %c0_16] : memref<1x384xf32, #tpu.memory_space<vmem>>, vector<1x384xf32>
    %23 = vector.broadcast %22 : vector<1x384xf32> to vector<16x384xf32>
    %24 = arith.addf %21, %23 : vector<16x384xf32>
    %cst_17 = arith.constant 0.000000e+00 : f32
    %25 = vector.broadcast %cst_17 : f32 to vector<16x384xf32>
    %26 = arith.maximumf %24, %25 : vector<16x384xf32>
    %c0_18 = arith.constant 0 : index
    %c0_19 = arith.constant 0 : index
    %27 = vector.load %arg8[%c0_18, %c0_19] : memref<1x384xbf16, #tpu.memory_space<vmem>>, vector<1x384xbf16>
    %28 = arith.extf %27 : vector<1x384xbf16> to vector<1x384xf32>
    %29 = vector.broadcast %28 : vector<1x384xf32> to vector<16x384xf32>
    %30 = arith.mulf %18, %29 : vector<16x384xf32>
    %cst_20 = arith.constant dense<0.000000e+00> : vector<16xf32>
    %31 = vector.multi_reduction <add>, %30, %cst_20 [1] : vector<16x384xf32> to vector<16xf32>
    %32 = vector.shape_cast %31 : vector<16xf32> to vector<16x1xf32>
    %c0_21 = arith.constant 0 : index
    %c0_22 = arith.constant 0 : index
    %33 = vector.load %arg9[%c0_21, %c0_22] : memref<1x384xbf16, #tpu.memory_space<vmem>>, vector<1x384xbf16>
    %34 = arith.extf %33 : vector<1x384xbf16> to vector<1x384xf32>
    %35 = vector.broadcast %34 : vector<1x384xf32> to vector<16x384xf32>
    %36 = arith.mulf %26, %35 : vector<16x384xf32>
    %cst_23 = arith.constant dense<0.000000e+00> : vector<16xf32>
    %37 = vector.multi_reduction <add>, %36, %cst_23 [1] : vector<16x384xf32> to vector<16xf32>
    %38 = vector.shape_cast %37 : vector<16xf32> to vector<16x1xf32>
    %39 = tpu.concatenate %32, %38 in 1 : vector<16x1xf32>, vector<16x1xf32> -> vector<16x2xf32>
    %c0_24 = arith.constant 0 : index
    %c0_25 = arith.constant 0 : index
    %40 = vector.load %arg10[%c0_24, %c0_25] : memref<1x2xf32, #tpu.memory_space<vmem>>, vector<1x2xf32>
    %41 = vector.broadcast %40 : vector<1x2xf32> to vector<16x2xf32>
    %42 = arith.addf %39, %41 : vector<16x2xf32>
    %c0_26 = arith.constant 0 : index
    %c0_27 = arith.constant 0 : index
    %43 = vector.load %arg11[%c0_26, %c0_27] : memref<16x2xf32, #tpu.memory_space<vmem>>, vector<16x2xf32>
    tpu.vector_store %arg11[%c0_26, %c0_27], %42 {strides = array<i32>} : memref<16x2xf32, #tpu.memory_space<vmem>>, vector<16x2xf32>,
    return
  }
  func.func @transform_0(%arg0: i32) -> (i32, i32) {
    %c0_i32 = arith.constant 0 : i32
    %c0_i32_0 = arith.constant 0 : i32
    return %arg0, %c0_i32 : i32, i32
  }
  func.func @transform_1(%arg0: i32) -> (i32, i32) {
    %c0_i32 = arith.constant 0 : i32
    %c0_i32_0 = arith.constant 0 : i32
    %c0_i32_1 = arith.constant 0 : i32
    return %c0_i32, %c0_i32_0 : i32, i32
  }
  func.func @transform_2(%arg0: i32) -> (i32, i32) {
    %c0_i32 = arith.constant 0 : i32
    %c0_i32_0 = arith.constant 0 : i32
    %c0_i32_1 = arith.constant 0 : i32
    return %c0_i32, %c0_i32_0 : i32, i32
  }
  func.func @transform_3(%arg0: i32) -> (i32, i32) {
    %c0_i32 = arith.constant 0 : i32
    %c0_i32_0 = arith.constant 0 : i32
    %c0_i32_1 = arith.constant 0 : i32
    return %c0_i32, %c0_i32_0 : i32, i32
  }
  func.func @transform_4(%arg0: i32) -> (i32, i32) {
    %c0_i32 = arith.constant 0 : i32
    %c0_i32_0 = arith.constant 0 : i32
    %c0_i32_1 = arith.constant 0 : i32
    return %c0_i32, %c0_i32_0 : i32, i32
  }
  func.func @transform_5(%arg0: i32) -> (i32, i32) {
    %c0_i32 = arith.constant 0 : i32
    %c0_i32_0 = arith.constant 0 : i32
    %c0_i32_1 = arith.constant 0 : i32
    return %c0_i32, %c0_i32_0 : i32, i32
  }
  func.func @transform_6(%arg0: i32) -> (i32, i32) {
    %c0_i32 = arith.constant 0 : i32
    %c0_i32_0 = arith.constant 0 : i32
    %c0_i32_1 = arith.constant 0 : i32
    return %c0_i32, %c0_i32_0 : i32, i32
  }
  func.func @transform_7(%arg0: i32) -> (i32, i32) {
    %c0_i32 = arith.constant 0 : i32
    %c0_i32_0 = arith.constant 0 : i32
    %c0_i32_1 = arith.constant 0 : i32
    return %c0_i32, %c0_i32_0 : i32, i32
  }
  func.func @transform_8(%arg0: i32) -> (i32, i32) {
    %c0_i32 = arith.constant 0 : i32
    %c0_i32_0 = arith.constant 0 : i32
    %c0_i32_1 = arith.constant 0 : i32
    return %c0_i32, %c0_i32_0 : i32, i32
  }
  func.func @transform_9(%arg0: i32) -> (i32, i32) {
    %c0_i32 = arith.constant 0 : i32
    %c0_i32_0 = arith.constant 0 : i32
    %c0_i32_1 = arith.constant 0 : i32
    return %c0_i32, %c0_i32_0 : i32, i32
  }
  func.func @transform_10(%arg0: i32) -> (i32, i32) {
    %c0_i32 = arith.constant 0 : i32
    %c0_i32_0 = arith.constant 0 : i32
    return %arg0, %c0_i32 : i32, i32
  }
}

</mosaic_0001>

<llo_original>
// kernel: tpu_custom_call.1
$region0: #{tpu_custom_call.1}
  #allocation0 [shape = 'u32[]', space=smem, size = 0x4, offset = 0x4, fixed_abs, tag = 'smem constant byte address 0x4 - core index']
  #allocation1 [shape = 'u32[72,128]{1,0:T(1,128)}', space=vmem, size = 0x9000, scoped, tag = 'internal scratch']
  %s0 = inlined_call_operand.hbm [shape: f32[16,32], index: 0, kind: input, shape index: {}]
  %s1 = inlined_call_operand.hbm [shape: bf16[32,1024], index: 1, kind: input, shape index: {}]
  %s2 = inlined_call_operand.hbm [shape: f32[1,1024], index: 2, kind: input, shape index: {}]
  %s3 = inlined_call_operand.hbm [shape: bf16[512,384], index: 3, kind: input, shape index: {}]
  %s4 = inlined_call_operand.vmem [shape: f32[1,384], index: 4, kind: input, shape index: {}]
  %s5 = inlined_call_operand.hbm [shape: bf16[512,384], index: 5, kind: input, shape index: {}]
  %s6 = inlined_call_operand.hbm [shape: f32[1,384], index: 6, kind: input, shape index: {}]
  %s7 = inlined_call_operand.vmem [shape: bf16[1,384], index: 7, kind: input, shape index: {}]
  %s8 = inlined_call_operand.hbm [shape: bf16[1,384], index: 8, kind: input, shape index: {}]
  %s9 = inlined_call_operand.vmem [shape: f32[1,2], index: 9, kind: input, shape index: {}]
  %s10 = inlined_call_operand.vmem [shape: f32[16,2], index: 10, kind: output, shape index: {}]
  %s11 = sld [smem:[#allocation0]]
  $region78: #{tpu_custom_call.1} parent=0
    _
  %s13 = ssub.s32 1, %s11
  %s14 = scalar_select 0, %s13, %s11
  $region1: #{tpu_custom_call.1} parent=0
    #allocation2 [shape = 'u8[8192]{0}', space=vmem, size = 0x2000, scoped, tag = 'input window, operand 0, single buffered']
    #allocation3 [shape = 's32[1]{0}', space=sflag, size = 0x4, scoped, tag = 'scoped memory for tpu_custom_call.1']
    #allocation4 [shape = 'u8[65536]{0}', space=vmem, size = 0x10000, scoped, tag = 'input window, operand 1, single buffered']
    #allocation5 [shape = 's32[1]{0}', space=sflag, size = 0x4, scoped, tag = 'scoped memory for tpu_custom_call.1']
    #allocation6 [shape = 'u8[4096]{0}', space=vmem, size = 0x1000, scoped, tag = 'input window, operand 2, single buffered']
    #allocation7 [shape = 'u8[393216]{0}', space=vmem, size = 0x60000, scoped, tag = 'input window, operand 3, single buffered']
    #allocation8 [shape = 's32[1]{0}', space=sflag, size = 0x4, scoped, tag = 'scoped memory for tpu_custom_call.1']
    #allocation9 [shape = 'u8[393216]{0}', space=vmem, size = 0x60000, scoped, tag = 'input window, operand 5, single buffered']
    #allocation10 [shape = 'u8[1536]{0}', space=vmem, size = 0x800, scoped, tag = 'input window, operand 6, single buffered']
    #allocation11 [shape = 's32[1]{0}', space=sflag, size = 0x4, scoped, tag = 'scoped memory for tpu_custom_call.1']
    #allocation12 [shape = 'u8[1536]{0}', space=vmem, size = 0x800, scoped, tag = 'input window, operand 8, single buffered']
    %15 = vsyncpa [#allocation3], 0
    %16 = vsyncpa [#allocation5], 0
    %17 = vsyncpa [#allocation8], 0
    %18 = vsyncpa [#allocation11], 0
    // Predicated region
    $region2: #{tpu_custom_call.1} parent=1 // pred_check
      _
    $region3: #{tpu_custom_call.1} parent=1 // pred_check_branch
      %20 = sbr.rel (0) target = $region5
    $region4: #{tpu_custom_call.1} parent=1 // pred_region
      %22 = vsyncadd [#allocation3], 0
      %s23 = sshll.u32 %s0, 4
      %s24 = int_to_ptr.hbm [resolvable:$true] %s23
      %s25 = sshll.u32 [#allocation2], 4
      %s26 = int_to_ptr.vmem [resolvable:$true] %s25
      %31 = dma.hbm_to_vmem [thread:$0]  %s24, 256, %s26, [#allocation3], 128, 128, 8
    $region5: #{tpu_custom_call.1} parent=1 // pred_fallthru
      _
    // Predicated region
    $region6: #{tpu_custom_call.1} parent=1 // pred_check
      _
    $region7: #{tpu_custom_call.1} parent=1 // pred_check_branch
      %33 = sbr.rel (0) target = $region9
    $region8: #{tpu_custom_call.1} parent=1 // pred_region
      %35 = vsyncadd [#allocation5], 0
      %s36 = sshll.u32 %s1, 4
      %s37 = int_to_ptr.hbm [resolvable:$true] %s36
      %s38 = sshll.u32 [#allocation4], 4
      %s39 = int_to_ptr.vmem [resolvable:$true] %s38
      %44 = dma.hbm_to_vmem [thread:$0]  %s37, 2048, %s39, [#allocation5], 512, 512, 32
    $region9: #{tpu_custom_call.1} parent=1 // pred_fallthru
      _
    // Predicated region
    $region10: #{tpu_custom_call.1} parent=1 // pred_check
      _
    $region11: #{tpu_custom_call.1} parent=1 // pred_check_branch
      %46 = sbr.rel (0) target = $region13
    $region12: #{tpu_custom_call.1} parent=1 // pred_region
      %48 = vsyncadd [#allocation5], 0
      %s50 = sshll.u32 %s2, 4
      %s51 = int_to_ptr.hbm [resolvable:$true] %s50
      %s52 = sshll.u32 [#allocation6], 4
      %s53 = int_to_ptr.vmem [resolvable:$true] %s52
      %55 = dma.hbm_to_vmem [thread:$0]  %s51, 128, %s53, [#allocation5]
    $region13: #{tpu_custom_call.1} parent=1 // pred_fallthru
      _
    // Predicated region
    $region14: #{tpu_custom_call.1} parent=1 // pred_check
      _
    $region15: #{tpu_custom_call.1} parent=1 // pred_check_branch
      %57 = sbr.rel (0) target = $region17
    $region16: #{tpu_custom_call.1} parent=1 // pred_region
      %59 = vsyncadd [#allocation8], 0
      %s60 = sshll.u32 %s3, 4
      %s61 = int_to_ptr.hbm [resolvable:$true] %s60
      %s62 = sshll.u32 [#allocation7], 4
      %s63 = int_to_ptr.vmem [resolvable:$true] %s62
      %68 = dma.hbm_to_vmem [thread:$0]  %s61, 12288, %s63, [#allocation8], 192, 192, 12
    $region17: #{tpu_custom_call.1} parent=1 // pred_fallthru
      _
    // Predicated region
    $region18: #{tpu_custom_call.1} parent=1 // pred_check
      _
    $region19: #{tpu_custom_call.1} parent=1 // pred_check_branch
      %70 = sbr.rel (0) target = $region21
    $region20: #{tpu_custom_call.1} parent=1 // pred_region
      _
    $region21: #{tpu_custom_call.1} parent=1 // pred_fallthru
      _
    // Predicated region
    $region22: #{tpu_custom_call.1} parent=1 // pred_check
      _
    $region23: #{tpu_custom_call.1} parent=1 // pred_check_branch
      %72 = sbr.rel (0) target = $region25
    $region24: #{tpu_custom_call.1} parent=1 // pred_region
      %74 = vsyncadd [#allocation8], 0
      %s75 = sshll.u32 %s5, 4
      %s76 = int_to_ptr.hbm [resolvable:$true] %s75
      %s77 = sshll.u32 [#allocation9], 4
      %s78 = int_to_ptr.vmem [resolvable:$true] %s77
      %83 = dma.hbm_to_vmem [thread:$0]  %s76, 12288, %s78, [#allocation8], 192, 192, 12
    $region25: #{tpu_custom_call.1} parent=1 // pred_fallthru
      _
    // Predicated region
    $region26: #{tpu_custom_call.1} parent=1 // pred_check
      _
    $region27: #{tpu_custom_call.1} parent=1 // pred_check_branch
      %85 = sbr.rel (0) target = $region29
    $region28: #{tpu_custom_call.1} parent=1 // pred_region
      %87 = vsyncadd [#allocation11], 0
      %s89 = sshll.u32 %s6, 4
      %s90 = int_to_ptr.hbm [resolvable:$true] %s89
      %s91 = sshll.u32 [#allocation10], 4
      %s92 = int_to_ptr.vmem [resolvable:$true] %s91
      %94 = dma.hbm_to_vmem [thread:$0]  %s90, 48, %s92, [#allocation11]
    $region29: #{tpu_custom_call.1} parent=1 // pred_fallthru
      _
    // Predicated region
    $region30: #{tpu_custom_call.1} parent=1 // pred_check
      _
    $region31: #{tpu_custom_call.1} parent=1 // pred_check_branch
      %96 = sbr.rel (0) target = $region33
    $region32: #{tpu_custom_call.1} parent=1 // pred_region
      _
    $region33: #{tpu_custom_call.1} parent=1 // pred_fallthru
      _
    // Predicated region
    $region34: #{tpu_custom_call.1} parent=1 // pred_check
      _
    $region35: #{tpu_custom_call.1} parent=1 // pred_check_branch
      %98 = sbr.rel (0) target = $region37
    $region36: #{tpu_custom_call.1} parent=1 // pred_region
      %100 = vsyncadd [#allocation11], 0
      %s102 = sshll.u32 %s8, 4
      %s103 = int_to_ptr.hbm [resolvable:$true] %s102
      %s104 = sshll.u32 [#allocation12], 4
      %s105 = int_to_ptr.vmem [resolvable:$true] %s104
      %107 = dma.hbm_to_vmem [thread:$0]  %s103, 48, %s105, [#allocation11]
    $region37: #{tpu_custom_call.1} parent=1 // pred_fallthru
      _
    // Predicated region
    $region38: #{tpu_custom_call.1} parent=1 // pred_check
      _
    $region39: #{tpu_custom_call.1} parent=1 // pred_check_branch
      %109 = sbr.rel (0) target = $region41
    $region40: #{tpu_custom_call.1} parent=1 // pred_region
      _
    $region41: #{tpu_custom_call.1} parent=1 // pred_fallthru
      _
    // Predicated region
    $region42: #{tpu_custom_call.1} parent=1 // pred_check
      _
    $region43: #{tpu_custom_call.1} parent=1 // pred_check_branch
      %111 = sbr.rel (0) target = $region45
    $region44: #{tpu_custom_call.1} parent=1 // pred_region
      %113 = dma.done [#allocation3], 256
    $region45: #{tpu_custom_call.1} parent=1 // pred_fallthru
      _
    // Predicated region
    $region46: #{tpu_custom_call.1} parent=1 // pred_check
      _
    $region47: #{tpu_custom_call.1} parent=1 // pred_check_branch
      %115 = sbr.rel (0) target = $region49
    $region48: #{tpu_custom_call.1} parent=1 // pred_region
      %117 = dma.done [#allocation5], 2048
    $region49: #{tpu_custom_call.1} parent=1 // pred_fallthru
      _
    // Predicated region
    $region50: #{tpu_custom_call.1} parent=1 // pred_check
      _
    $region51: #{tpu_custom_call.1} parent=1 // pred_check_branch
      %119 = sbr.rel (0) target = $region53
    $region52: #{tpu_custom_call.1} parent=1 // pred_region
      %121 = dma.done [#allocation5], 128
    $region53: #{tpu_custom_call.1} parent=1 // pred_fallthru
      _
    // Predicated region
    $region54: #{tpu_custom_call.1} parent=1 // pred_check
      _
    $region55: #{tpu_custom_call.1} parent=1 // pred_check_branch
      %123 = sbr.rel (0) target = $region57
    $region56: #{tpu_custom_call.1} parent=1 // pred_region
      %125 = dma.done [#allocation8], 12288
    $region57: #{tpu_custom_call.1} parent=1 // pred_fallthru
      _
    // Predicated region
    $region58: #{tpu_custom_call.1} parent=1 // pred_check
      _
    $region59: #{tpu_custom_call.1} parent=1 // pred_check_branch
      %127 = sbr.rel (0) target = $region61
    $region60: #{tpu_custom_call.1} parent=1 // pred_region
      %129 = dma.done [#allocation8], 12288
    $region61: #{tpu_custom_call.1} parent=1 // pred_fallthru
      _
    // Predicated region
    $region62: #{tpu_custom_call.1} parent=1 // pred_check
      _
    $region63: #{tpu_custom_call.1} parent=1 // pred_check_branch
      %131 = sbr.rel (0) target = $region65
    $region64: #{tpu_custom_call.1} parent=1 // pred_region
      %133 = dma.done [#allocation11], 48
    $region65: #{tpu_custom_call.1} parent=1 // pred_fallthru
      _
    // Predicated region
    $region66: #{tpu_custom_call.1} parent=1 // pred_check
      _
    $region67: #{tpu_custom_call.1} parent=1 // pred_check_branch
      %135 = sbr.rel (0) target = $region69
    $region68: #{tpu_custom_call.1} parent=1 // pred_region
      %137 = dma.done [#allocation11], 48
    $region69: #{tpu_custom_call.1} parent=1 // pred_fallthru
      _
    %v139 = vld [vmem:[#allocation2] sm:$0xff]
    %v140 = vld [vmem:[#allocation2 + $0x8] sm:$0xff]
    %v141 = vpack.c.bf16 %v140, %v139
    %v142 = vld [vmem:[#allocation4] sm:$0xff]
    %v143 = vld [vmem:[#allocation4 + $0x8] sm:$0xff]
    %v144 = vld [vmem:[#allocation4 + $0x10] sm:$0xff]
    %v145 = vld [vmem:[#allocation4 + $0x18] sm:$0xff]
    %v146 = vld [vmem:[#allocation4 + $0x20] sm:$0xff]
    %v147 = vld [vmem:[#allocation4 + $0x28] sm:$0xff]
    %v148 = vld [vmem:[#allocation4 + $0x30] sm:$0xff]
    %v149 = vld [vmem:[#allocation4 + $0x38] sm:$0xff]
    %v150 = vld [vmem:[#allocation4 + $0x40] sm:$0xff]
    %v151 = vld [vmem:[#allocation4 + $0x48] sm:$0xff]
    %v152 = vld [vmem:[#allocation4 + $0x50] sm:$0xff]
    %v153 = vld [vmem:[#allocation4 + $0x58] sm:$0xff]
    %v154 = vld [vmem:[#allocation4 + $0x60] sm:$0xff]
    %v155 = vld [vmem:[#allocation4 + $0x68] sm:$0xff]
    %v156 = vld [vmem:[#allocation4 + $0x70] sm:$0xff]
    %v157 = vld [vmem:[#allocation4 + $0x78] sm:$0xff]
    %v158 = vld [vmem:[#allocation6] sm:$0xff]
    %v160 = vperm.slane %v158, 0
    %v161 = vperm.slane %v158, 1
    %v162 = vperm.slane %v158, 2
    %v163 = vperm.slane %v158, 3
    %v164 = vperm.slane %v158, 4
    %v165 = vperm.slane %v158, 5
    %v166 = vperm.slane %v158, 6
    %v167 = vperm.slane %v158, 7
    %v192 = vunpack.c.l.b16 %v142
    %v193 = vunpack.c.h.b16 %v142
    %v194 = vunpack.c.l.b16 %v143
    %v195 = vunpack.c.h.b16 %v143
    %v196 = vunpack.c.l.b16 %v144
    %v197 = vunpack.c.h.b16 %v144
    %v198 = vunpack.c.l.b16 %v145
    %v199 = vunpack.c.h.b16 %v145
    %v200 = vunpack.c.l.b16 %v146
    %v201 = vunpack.c.h.b16 %v146
    %v202 = vunpack.c.l.b16 %v147
    %v203 = vunpack.c.h.b16 %v147
    %v204 = vunpack.c.l.b16 %v148
    %v205 = vunpack.c.h.b16 %v148
    %v206 = vunpack.c.l.b16 %v149
    %v207 = vunpack.c.h.b16 %v149
    %v208 = vunpack.c.l.b16 %v150
    %v209 = vunpack.c.h.b16 %v150
    %v210 = vunpack.c.l.b16 %v151
    %v211 = vunpack.c.h.b16 %v151
    %v212 = vunpack.c.l.b16 %v152
    %v213 = vunpack.c.h.b16 %v152
    %v214 = vunpack.c.l.b16 %v153
    %v215 = vunpack.c.h.b16 %v153
    %v216 = vunpack.c.l.b16 %v154
    %v217 = vunpack.c.h.b16 %v154
    %v218 = vunpack.c.l.b16 %v155
    %v219 = vunpack.c.h.b16 %v155
    %v220 = vunpack.c.l.b16 %v156
    %v221 = vunpack.c.h.b16 %v156
    %v222 = vunpack.c.l.b16 %v157
    %v223 = vunpack.c.h.b16 %v157
    %v224 = vpack.c.b16 %v200, %v192
    %v225 = vpack.c.b16 %v201, %v193
    %v226 = vpack.c.b16 %v202, %v194
    %v227 = vpack.c.b16 %v203, %v195
    %v228 = vpack.c.b16 %v204, %v196
    %v229 = vpack.c.b16 %v205, %v197
    %v230 = vpack.c.b16 %v206, %v198
    %v231 = vpack.c.b16 %v207, %v199
    %v232 = vpack.c.b16 %v216, %v208
    %v233 = vpack.c.b16 %v217, %v209
    %v234 = vpack.c.b16 %v218, %v210
    %v235 = vpack.c.b16 %v219, %v211
    %v236 = vpack.c.b16 %v220, %v212
    %v237 = vpack.c.b16 %v221, %v213
    %v238 = vpack.c.b16 %v222, %v214
    %v239 = vpack.c.b16 %v223, %v215
    %vm256 = vcmask 261120
    %v258 = vsel %vm256, %v141, 0
    %260 = vmatpush.bf16.msra.mxu0 0
    %261 = vmatpush.bf16.msra.mxu0 0
    %262 = vmatpush.bf16.msra.mxu0 0
    %263 = vmatpush.bf16.msra.mxu0 0
    %264 = vmatpush.bf16.msra.mxu0 0
    %265 = vmatpush.bf16.msra.mxu0 0
    %266 = vmatpush.bf16.msra.mxu0 %v232
    %267 = vmatpush.bf16.msra.mxu0 %v224
    %268 = vmatmul.bf16.gmra.mxu0 %v258
    %v269 = vpop.f32.mrf.mxu0
    %v270 = vadd.f32 %v160, %v269
    %v271 = vpop.f32.mrf.mxu0
    %v272 = vadd.f32 %v160, %v271
    %273 = vdwg.mxu0
    %274 = vmatpush.bf16.msra.mxu0 0
    %275 = vmatpush.bf16.msra.mxu0 0
    %276 = vmatpush.bf16.msra.mxu0 0
    %277 = vmatpush.bf16.msra.mxu0 0
    %278 = vmatpush.bf16.msra.mxu0 0
    %279 = vmatpush.bf16.msra.mxu0 0
    %280 = vmatpush.bf16.msra.mxu0 %v233
    %281 = vmatpush.bf16.msra.mxu0 %v225
    %282 = vmatmul.bf16.gmra.mxu0 %v258
    %v283 = vpop.f32.mrf.mxu0
    %v284 = vadd.f32 %v161, %v283
    %v285 = vpop.f32.mrf.mxu0
    %v286 = vadd.f32 %v161, %v285
    %287 = vdwg.mxu0
    %288 = vmatpush.bf16.msra.mxu0 0
    %289 = vmatpush.bf16.msra.mxu0 0
    %290 = vmatpush.bf16.msra.mxu0 0
    %291 = vmatpush.bf16.msra.mxu0 0
    %292 = vmatpush.bf16.msra.mxu0 0
    %293 = vmatpush.bf16.msra.mxu0 0
    %294 = vmatpush.bf16.msra.mxu0 %v234
    %295 = vmatpush.bf16.msra.mxu0 %v226
    %296 = vmatmul.bf16.gmra.mxu0 %v258
    %v297 = vpop.f32.mrf.mxu0
    %v298 = vadd.f32 %v162, %v297
    %v299 = vpop.f32.mrf.mxu0
    %v300 = vadd.f32 %v162, %v299
    %301 = vdwg.mxu0
    %302 = vmatpush.bf16.msra.mxu0 0
    %303 = vmatpush.bf16.msra.mxu0 0
    %304 = vmatpush.bf16.msra.mxu0 0
    %305 = vmatpush.bf16.msra.mxu0 0
    %306 = vmatpush.bf16.msra.mxu0 0
    %307 = vmatpush.bf16.msra.mxu0 0
    %308 = vmatpush.bf16.msra.mxu0 %v235
    %309 = vmatpush.bf16.msra.mxu0 %v227
    %310 = vmatmul.bf16.gmra.mxu0 %v258
    %v311 = vpop.f32.mrf.mxu0
    %v312 = vadd.f32 %v163, %v311
    %v313 = vpop.f32.mrf.mxu0
    %v314 = vadd.f32 %v163, %v313
    %315 = vdwg.mxu0
    %316 = vmatpush.bf16.msra.mxu0 0
    %317 = vmatpush.bf16.msra.mxu0 0
    %318 = vmatpush.bf16.msra.mxu0 0
    %319 = vmatpush.bf16.msra.mxu0 0
    %320 = vmatpush.bf16.msra.mxu0 0
    %321 = vmatpush.bf16.msra.mxu0 0
    %322 = vmatpush.bf16.msra.mxu0 %v236
    %323 = vmatpush.bf16.msra.mxu0 %v228
    %324 = vmatmul.bf16.gmra.mxu0 %v258
    %v325 = vpop.f32.mrf.mxu0
    %v326 = vadd.f32 %v164, %v325
    %v327 = vpop.f32.mrf.mxu0
    %v328 = vadd.f32 %v164, %v327
    %329 = vdwg.mxu0
    %330 = vmatpush.bf16.msra.mxu0 0
    %331 = vmatpush.bf16.msra.mxu0 0
    %332 = vmatpush.bf16.msra.mxu0 0
    %333 = vmatpush.bf16.msra.mxu0 0
    %334 = vmatpush.bf16.msra.mxu0 0
    %335 = vmatpush.bf16.msra.mxu0 0
    %336 = vmatpush.bf16.msra.mxu0 %v237
    %337 = vmatpush.bf16.msra.mxu0 %v229
    %338 = vmatmul.bf16.gmra.mxu0 %v258
    %v339 = vpop.f32.mrf.mxu0
    %v340 = vadd.f32 %v165, %v339
    %v341 = vpop.f32.mrf.mxu0
    %v342 = vadd.f32 %v165, %v341
    %343 = vdwg.mxu0
    %344 = vmatpush.bf16.msra.mxu0 0
    %345 = vmatpush.bf16.msra.mxu0 0
    %346 = vmatpush.bf16.msra.mxu0 0
    %347 = vmatpush.bf16.msra.mxu0 0
    %348 = vmatpush.bf16.msra.mxu0 0
    %349 = vmatpush.bf16.msra.mxu0 0
    %350 = vmatpush.bf16.msra.mxu0 %v238
    %351 = vmatpush.bf16.msra.mxu0 %v230
    %352 = vmatmul.bf16.gmra.mxu0 %v258
    %v353 = vpop.f32.mrf.mxu0
    %v354 = vadd.f32 %v166, %v353
    %v355 = vpop.f32.mrf.mxu0
    %v356 = vadd.f32 %v166, %v355
    %357 = vdwg.mxu0
    %358 = vmatpush.bf16.msra.mxu0 0
    %359 = vmatpush.bf16.msra.mxu0 0
    %360 = vmatpush.bf16.msra.mxu0 0
    %361 = vmatpush.bf16.msra.mxu0 0
    %362 = vmatpush.bf16.msra.mxu0 0
    %363 = vmatpush.bf16.msra.mxu0 0
    %364 = vmatpush.bf16.msra.mxu0 %v239
    %365 = vmatpush.bf16.msra.mxu0 %v231
    %366 = vmatmul.bf16.gmra.mxu0 %v258
    %v367 = vpop.f32.mrf.mxu0
    %v368 = vadd.f32 %v167, %v367
    %v369 = vpop.f32.mrf.mxu0
    %v370 = vadd.f32 %v167, %v369
    %371 = vdwg.mxu0
    %v372 = vmax.f32 %v270, 0.0
    %v373 = vmax.f32 %v284, 0.0
    %v374 = vmax.f32 %v298, 0.0
    %v375 = vmax.f32 %v312, 0.0
    %v376 = vmax.f32 %v326, 0.0
    %v377 = vmax.f32 %v340, 0.0
    %v378 = vmax.f32 %v354, 0.0
    %v379 = vmax.f32 %v368, 0.0
    %v380 = vmax.f32 %v272, 0.0
    %v381 = vmax.f32 %v286, 0.0
    %v382 = vmax.f32 %v300, 0.0
    %v383 = vmax.f32 %v314, 0.0
    %v384 = vmax.f32 %v328, 0.0
    %v385 = vmax.f32 %v342, 0.0
    %v386 = vmax.f32 %v356, 0.0
    %v387 = vmax.f32 %v370, 0.0
    %v388 = vpack.c.bf16 %v380, %v372
    %v389 = vpack.c.bf16 %v381, %v373
    %v390 = vpack.c.bf16 %v382, %v374
    %v391 = vpack.c.bf16 %v383, %v375
    %v392 = vld [vmem:[#allocation7] sm:$0xff]
    %v393 = vld [vmem:[#allocation7 + $0x8] sm:$0xf]
    %v394 = vld [vmem:[#allocation7 + $0xc] sm:$0xff]
    %v395 = vld [vmem:[#allocation7 + $0x14] sm:$0xf]
    %v396 = vld [vmem:[#allocation7 + $0x18] sm:$0xff]
    %v397 = vld [vmem:[#allocation7 + $0x20] sm:$0xf]
    %v398 = vld [vmem:[#allocation7 + $0x24] sm:$0xff]
    %v399 = vld [vmem:[#allocation7 + $0x2c] sm:$0xf]
    %v400 = vld [vmem:[#allocation7 + $0x30] sm:$0xff]
    %v401 = vld [vmem:[#allocation7 + $0x38] sm:$0xf]
    %v402 = vld [vmem:[#allocation7 + $0x3c] sm:$0xff]
    %v403 = vld [vmem:[#allocation7 + $0x44] sm:$0xf]
    %v404 = vld [vmem:[#allocation7 + $0x48] sm:$0xff]
    %v405 = vld [vmem:[#allocation7 + $0x50] sm:$0xf]
    %v406 = vld [vmem:[#allocation7 + $0x54] sm:$0xff]
    %v407 = vld [vmem:[#allocation7 + $0x5c] sm:$0xf]
    %v408 = vld [vmem:[#allocation7 + $0x60] sm:$0xff]
    %v409 = vld [vmem:[#allocation7 + $0x68] sm:$0xf]
    %v410 = vld [vmem:[#allocation7 + $0x6c] sm:$0xff]
    %v411 = vld [vmem:[#allocation7 + $0x74] sm:$0xf]
    %v412 = vld [vmem:[#allocation7 + $0x78] sm:$0xff]
    %v413 = vld [vmem:[#allocation7 + $0x80] sm:$0xf]
    %v414 = vld [vmem:[#allocation7 + $0x84] sm:$0xff]
    %v415 = vld [vmem:[#allocation7 + $0x8c] sm:$0xf]
    %v416 = vld [vmem:[#allocation7 + $0x90] sm:$0xff]
    %v417 = vld [vmem:[#allocation7 + $0x98] sm:$0xf]
    %v418 = vld [vmem:[#allocation7 + $0x9c] sm:$0xff]
    %v419 = vld [vmem:[#allocation7 + $0xa4] sm:$0xf]
    %v420 = vld [vmem:[#allocation7 + $0xa8] sm:$0xff]
    %v421 = vld [vmem:[#allocation7 + $0xb0] sm:$0xf]
    %v422 = vld [vmem:[#allocation7 + $0xb4] sm:$0xff]
    %v423 = vld [vmem:[#allocation7 + $0xbc] sm:$0xf]
    %v424 = vld [vmem:[#allocation7 + $0xc0] sm:$0xff]
    %v425 = vld [vmem:[#allocation7 + $0xc8] sm:$0xf]
    %v426 = vld [vmem:[#allocation7 + $0xcc] sm:$0xff]
    %v427 = vld [vmem:[#allocation7 + $0xd4] sm:$0xf]
    %v428 = vld [vmem:[#allocation7 + $0xd8] sm:$0xff]
    %v429 = vld [vmem:[#allocation7 + $0xe0] sm:$0xf]
    %v430 = vld [vmem:[#allocation7 + $0xe4] sm:$0xff]
    %v431 = vld [vmem:[#allocation7 + $0xec] sm:$0xf]
    %v432 = vld [vmem:[#allocation7 + $0xf0] sm:$0xff]
    %v433 = vld [vmem:[#allocation7 + $0xf8] sm:$0xf]
    %v434 = vld [vmem:[#allocation7 + $0xfc] sm:$0xff]
    %v435 = vld [vmem:[#allocation7 + $0x104] sm:$0xf]
    %v436 = vld [vmem:[#allocation7 + $0x108] sm:$0xff]
    %v437 = vld [vmem:[#allocation7 + $0x110] sm:$0xf]
    %v438 = vld [vmem:[#allocation7 + $0x114] sm:$0xff]
    %v439 = vld [vmem:[#allocation7 + $0x11c] sm:$0xf]
    %v440 = vld [vmem:[#allocation7 + $0x120] sm:$0xff]
    %v441 = vld [vmem:[#allocation7 + $0x128] sm:$0xf]
    %v442 = vld [vmem:[#allocation7 + $0x12c] sm:$0xff]
    %v443 = vld [vmem:[#allocation7 + $0x134] sm:$0xf]
    %v444 = vld [vmem:[#allocation7 + $0x138] sm:$0xff]
    %v445 = vld [vmem:[#allocation7 + $0x140] sm:$0xf]
    %v446 = vld [vmem:[#allocation7 + $0x144] sm:$0xff]
    %v447 = vld [vmem:[#allocation7 + $0x14c] sm:$0xf]
    %v448 = vld [vmem:[#allocation7 + $0x150] sm:$0xff]
    %v449 = vld [vmem:[#allocation7 + $0x158] sm:$0xf]
    %v450 = vld [vmem:[#allocation7 + $0x15c] sm:$0xff]
    %v451 = vld [vmem:[#allocation7 + $0x164] sm:$0xf]
    %v452 = vld [vmem:[#allocation7 + $0x168] sm:$0xff]
    %v453 = vld [vmem:[#allocation7 + $0x170] sm:$0xf]
    %v454 = vld [vmem:[#allocation7 + $0x174] sm:$0xff]
    %v455 = vld [vmem:[#allocation7 + $0x17c] sm:$0xf]
    %v456 = vld [vmem:[#allocation7 + $0x180] sm:$0xff]
    %v457 = vld [vmem:[#allocation7 + $0x188] sm:$0xf]
    %v458 = vld [vmem:[#allocation7 + $0x18c] sm:$0xff]
    %v459 = vld [vmem:[#allocation7 + $0x194] sm:$0xf]
    %v460 = vld [vmem:[#allocation7 + $0x198] sm:$0xff]
    %v461 = vld [vmem:[#allocation7 + $0x1a0] sm:$0xf]
    %v462 = vld [vmem:[#allocation7 + $0x1a4] sm:$0xff]
    %v463 = vld [vmem:[#allocation7 + $0x1ac] sm:$0xf]
    %v464 = vld [vmem:[#allocation7 + $0x1b0] sm:$0xff]
    %v465 = vld [vmem:[#allocation7 + $0x1b8] sm:$0xf]
    %v466 = vld [vmem:[#allocation7 + $0x1bc] sm:$0xff]
    %v467 = vld [vmem:[#allocation7 + $0x1c4] sm:$0xf]
    %v468 = vld [vmem:[#allocation7 + $0x1c8] sm:$0xff]
    %v469 = vld [vmem:[#allocation7 + $0x1d0] sm:$0xf]
    %v470 = vld [vmem:[#allocation7 + $0x1d4] sm:$0xff]
    %v471 = vld [vmem:[#allocation7 + $0x1dc] sm:$0xf]
    %v472 = vld [vmem:[#allocation7 + $0x1e0] sm:$0xff]
    %v473 = vld [vmem:[#allocation7 + $0x1e8] sm:$0xf]
    %v474 = vld [vmem:[#allocation7 + $0x1ec] sm:$0xff]
    %v475 = vld [vmem:[#allocation7 + $0x1f4] sm:$0xf]
    %v476 = vld [vmem:[#allocation7 + $0x1f8] sm:$0xff]
    %v477 = vld [vmem:[#allocation7 + $0x200] sm:$0xf]
    %v478 = vld [vmem:[#allocation7 + $0x204] sm:$0xff]
    %v479 = vld [vmem:[#allocation7 + $0x20c] sm:$0xf]
    %v480 = vld [vmem:[#allocation7 + $0x210] sm:$0xff]
    %v481 = vld [vmem:[#allocation7 + $0x218] sm:$0xf]
    %v482 = vld [vmem:[#allocation7 + $0x21c] sm:$0xff]
    %v483 = vld [vmem:[#allocation7 + $0x224] sm:$0xf]
    %v484 = vld [vmem:[#allocation7 + $0x228] sm:$0xff]
    %v485 = vld [vmem:[#allocation7 + $0x230] sm:$0xf]
    %v486 = vld [vmem:[#allocation7 + $0x234] sm:$0xff]
    %v487 = vld [vmem:[#allocation7 + $0x23c] sm:$0xf]
    %v488 = vld [vmem:[#allocation7 + $0x240] sm:$0xff]
    %v489 = vld [vmem:[#allocation7 + $0x248] sm:$0xf]
    %v490 = vld [vmem:[#allocation7 + $0x24c] sm:$0xff]
    %v491 = vld [vmem:[#allocation7 + $0x254] sm:$0xf]
    %v492 = vld [vmem:[#allocation7 + $0x258] sm:$0xff]
    %v493 = vld [vmem:[#allocation7 + $0x260] sm:$0xf]
    %v494 = vld [vmem:[#allocation7 + $0x264] sm:$0xff]
    %v495 = vld [vmem:[#allocation7 + $0x26c] sm:$0xf]
    %v496 = vld [vmem:[#allocation7 + $0x270] sm:$0xff]
    %v497 = vld [vmem:[#allocation7 + $0x278] sm:$0xf]
    %v498 = vld [vmem:[#allocation7 + $0x27c] sm:$0xff]
    %v499 = vld [vmem:[#allocation7 + $0x284] sm:$0xf]
    %v500 = vld [vmem:[#allocation7 + $0x288] sm:$0xff]
    %v501 = vld [vmem:[#allocation7 + $0x290] sm:$0xf]
    %v502 = vld [vmem:[#allocation7 + $0x294] sm:$0xff]
    %v503 = vld [vmem:[#allocation7 + $0x29c] sm:$0xf]
    %v504 = vld [vmem:[#allocation7 + $0x2a0] sm:$0xff]
    %v505 = vld [vmem:[#allocation7 + $0x2a8] sm:$0xf]
    %v506 = vld [vmem:[#allocation7 + $0x2ac] sm:$0xff]
    %v507 = vld [vmem:[#allocation7 + $0x2b4] sm:$0xf]
    %v508 = vld [vmem:[#allocation7 + $0x2b8] sm:$0xff]
    %v509 = vld [vmem:[#allocation7 + $0x2c0] sm:$0xf]
    %v510 = vld [vmem:[#allocation7 + $0x2c4] sm:$0xff]
    %v511 = vld [vmem:[#allocation7 + $0x2cc] sm:$0xf]
    %v512 = vld [vmem:[#allocation7 + $0x2d0] sm:$0xff]
    %v513 = vld [vmem:[#allocation7 + $0x2d8] sm:$0xf]
    %v514 = vld [vmem:[#allocation7 + $0x2dc] sm:$0xff]
    %v515 = vld [vmem:[#allocation7 + $0x2e4] sm:$0xf]
    %v516 = vld [vmem:[#allocation7 + $0x2e8] sm:$0xff]
    %v517 = vld [vmem:[#allocation7 + $0x2f0] sm:$0xf]
    %v518 = vld [vmem:[#allocation7 + $0x2f4] sm:$0xff]
    %v519 = vld [vmem:[#allocation7 + $0x2fc] sm:$0xf]
    %v520 = vld [vmem:[%s4] sm:$0x7]
    %v522 = vperm.slane %v520, 0
    %v523 = vperm.slane %v520, 1
    %v524 = vperm.slane %v520, 2
    %v656 = vunpack.c.l.b16 %v392
    %v657 = vunpack.c.h.b16 %v392
    %v658 = vunpack.c.l.b16 %v393
    %v659 = vunpack.c.l.b16 %v394
    %v660 = vunpack.c.h.b16 %v394
    %v661 = vunpack.c.l.b16 %v395
    %v662 = vunpack.c.l.b16 %v396
    %v663 = vunpack.c.h.b16 %v396
    %v664 = vunpack.c.l.b16 %v397
    %v665 = vunpack.c.l.b16 %v398
    %v666 = vunpack.c.h.b16 %v398
    %v667 = vunpack.c.l.b16 %v399
    %v668 = vunpack.c.l.b16 %v400
    %v669 = vunpack.c.h.b16 %v400
    %v670 = vunpack.c.l.b16 %v401
    %v671 = vunpack.c.l.b16 %v402
    %v672 = vunpack.c.h.b16 %v402
    %v673 = vunpack.c.l.b16 %v403
    %v674 = vunpack.c.l.b16 %v404
    %v675 = vunpack.c.h.b16 %v404
    %v676 = vunpack.c.l.b16 %v405
    %v677 = vunpack.c.l.b16 %v406
    %v678 = vunpack.c.h.b16 %v406
    %v679 = vunpack.c.l.b16 %v407
    %v680 = vunpack.c.l.b16 %v408
    %v681 = vunpack.c.h.b16 %v408
    %v682 = vunpack.c.l.b16 %v409
    %v683 = vunpack.c.l.b16 %v410
    %v684 = vunpack.c.h.b16 %v410
    %v685 = vunpack.c.l.b16 %v411
    %v686 = vunpack.c.l.b16 %v412
    %v687 = vunpack.c.h.b16 %v412
    %v688 = vunpack.c.l.b16 %v413
    %v689 = vunpack.c.l.b16 %v414
    %v690 = vunpack.c.h.b16 %v414
    %v691 = vunpack.c.l.b16 %v415
    %v692 = vunpack.c.l.b16 %v416
    %v693 = vunpack.c.h.b16 %v416
    %v694 = vunpack.c.l.b16 %v417
    %v695 = vunpack.c.l.b16 %v418
    %v696 = vunpack.c.h.b16 %v418
    %v697 = vunpack.c.l.b16 %v419
    %v698 = vunpack.c.l.b16 %v420
    %v699 = vunpack.c.h.b16 %v420
    %v700 = vunpack.c.l.b16 %v421
    %v701 = vunpack.c.l.b16 %v422
    %v702 = vunpack.c.h.b16 %v422
    %v703 = vunpack.c.l.b16 %v423
    %v704 = vunpack.c.l.b16 %v424
    %v705 = vunpack.c.h.b16 %v424
    %v706 = vunpack.c.l.b16 %v425
    %v707 = vunpack.c.l.b16 %v426
    %v708 = vunpack.c.h.b16 %v426
    %v709 = vunpack.c.l.b16 %v427
    %v710 = vunpack.c.l.b16 %v428
    %v711 = vunpack.c.h.b16 %v428
    %v712 = vunpack.c.l.b16 %v429
    %v713 = vunpack.c.l.b16 %v430
    %v714 = vunpack.c.h.b16 %v430
    %v715 = vunpack.c.l.b16 %v431
    %v716 = vunpack.c.l.b16 %v432
    %v717 = vunpack.c.h.b16 %v432
    %v718 = vunpack.c.l.b16 %v433
    %v719 = vunpack.c.l.b16 %v434
    %v720 = vunpack.c.h.b16 %v434
    %v721 = vunpack.c.l.b16 %v435
    %v722 = vunpack.c.l.b16 %v436
    %v723 = vunpack.c.h.b16 %v436
    %v724 = vunpack.c.l.b16 %v437
    %v725 = vunpack.c.l.b16 %v438
    %v726 = vunpack.c.h.b16 %v438
    %v727 = vunpack.c.l.b16 %v439
    %v728 = vunpack.c.l.b16 %v440
    %v729 = vunpack.c.h.b16 %v440
    %v730 = vunpack.c.l.b16 %v441
    %v731 = vunpack.c.l.b16 %v442
    %v732 = vunpack.c.h.b16 %v442
    %v733 = vunpack.c.l.b16 %v443
    %v734 = vunpack.c.l.b16 %v444
    %v735 = vunpack.c.h.b16 %v444
    %v736 = vunpack.c.l.b16 %v445
    %v737 = vunpack.c.l.b16 %v446
    %v738 = vunpack.c.h.b16 %v446
    %v739 = vunpack.c.l.b16 %v447
    %v740 = vunpack.c.l.b16 %v448
    %v741 = vunpack.c.h.b16 %v448
    %v742 = vunpack.c.l.b16 %v449
    %v743 = vunpack.c.l.b16 %v450
    %v744 = vunpack.c.h.b16 %v450
    %v745 = vunpack.c.l.b16 %v451
    %v746 = vunpack.c.l.b16 %v452
    %v747 = vunpack.c.h.b16 %v452
    %v748 = vunpack.c.l.b16 %v453
    %v749 = vunpack.c.l.b16 %v454
    %v750 = vunpack.c.h.b16 %v454
    %v751 = vunpack.c.l.b16 %v455
    %v752 = vunpack.c.l.b16 %v456
    %v753 = vunpack.c.h.b16 %v456
    %v754 = vunpack.c.l.b16 %v457
    %v755 = vunpack.c.l.b16 %v458
    %v756 = vunpack.c.h.b16 %v458
    %v757 = vunpack.c.l.b16 %v459
    %v758 = vunpack.c.l.b16 %v460
    %v759 = vunpack.c.h.b16 %v460
    %v760 = vunpack.c.l.b16 %v461
    %v761 = vunpack.c.l.b16 %v462
    %v762 = vunpack.c.h.b16 %v462
    %v763 = vunpack.c.l.b16 %v463
    %v764 = vunpack.c.l.b16 %v464
    %v765 = vunpack.c.h.b16 %v464
    %v766 = vunpack.c.l.b16 %v465
    %v767 = vunpack.c.l.b16 %v466
    %v768 = vunpack.c.h.b16 %v466
    %v769 = vunpack.c.l.b16 %v467
    %v770 = vunpack.c.l.b16 %v468
    %v771 = vunpack.c.h.b16 %v468
    %v772 = vunpack.c.l.b16 %v469
    %v773 = vunpack.c.l.b16 %v470
    %v774 = vunpack.c.h.b16 %v470
    %v775 = vunpack.c.l.b16 %v471
    %v776 = vunpack.c.l.b16 %v472
    %v777 = vunpack.c.h.b16 %v472
    %v778 = vunpack.c.l.b16 %v473
    %v779 = vunpack.c.l.b16 %v474
    %v780 = vunpack.c.h.b16 %v474
    %v781 = vunpack.c.l.b16 %v475
    %v782 = vunpack.c.l.b16 %v476
    %v783 = vunpack.c.h.b16 %v476
    %v784 = vunpack.c.l.b16 %v477
    %v785 = vunpack.c.l.b16 %v478
    %v786 = vunpack.c.h.b16 %v478
    %v787 = vunpack.c.l.b16 %v479
    %v788 = vunpack.c.l.b16 %v480
    %v789 = vunpack.c.h.b16 %v480
    %v790 = vunpack.c.l.b16 %v481
    %v791 = vunpack.c.l.b16 %v482
    %v792 = vunpack.c.h.b16 %v482
    %v793 = vunpack.c.l.b16 %v483
    %v794 = vunpack.c.l.b16 %v484
    %v795 = vunpack.c.h.b16 %v484
    %v796 = vunpack.c.l.b16 %v485
    %v797 = vunpack.c.l.b16 %v486
    %v798 = vunpack.c.h.b16 %v486
    %v799 = vunpack.c.l.b16 %v487
    %v800 = vunpack.c.l.b16 %v488
    %v801 = vunpack.c.h.b16 %v488
    %v802 = vunpack.c.l.b16 %v489
    %v803 = vunpack.c.l.b16 %v490
    %v804 = vunpack.c.h.b16 %v490
    %v805 = vunpack.c.l.b16 %v491
    %v806 = vunpack.c.l.b16 %v492
    %v807 = vunpack.c.h.b16 %v492
    %v808 = vunpack.c.l.b16 %v493
    %v809 = vunpack.c.l.b16 %v494
    %v810 = vunpack.c.h.b16 %v494
    %v811 = vunpack.c.l.b16 %v495
    %v812 = vunpack.c.l.b16 %v496
    %v813 = vunpack.c.h.b16 %v496
    %v814 = vunpack.c.l.b16 %v497
    %v815 = vunpack.c.l.b16 %v498
    %v816 = vunpack.c.h.b16 %v498
    %v817 = vunpack.c.l.b16 %v499
    %v818 = vunpack.c.l.b16 %v500
    %v819 = vunpack.c.h.b16 %v500
    %v820 = vunpack.c.l.b16 %v501
    %v821 = vunpack.c.l.b16 %v502
    %v822 = vunpack.c.h.b16 %v502
    %v823 = vunpack.c.l.b16 %v503
    %v824 = vunpack.c.l.b16 %v504
    %v825 = vunpack.c.h.b16 %v504
    %v826 = vunpack.c.l.b16 %v505
    %v827 = vunpack.c.l.b16 %v506
    %v828 = vunpack.c.h.b16 %v506
    %v829 = vunpack.c.l.b16 %v507
    %v830 = vunpack.c.l.b16 %v508
    %v831 = vunpack.c.h.b16 %v508
    %v832 = vunpack.c.l.b16 %v509
    %v833 = vunpack.c.l.b16 %v510
    %v834 = vunpack.c.h.b16 %v510
    %v835 = vunpack.c.l.b16 %v511
    %v836 = vunpack.c.l.b16 %v512
    %v837 = vunpack.c.h.b16 %v512
    %v838 = vunpack.c.l.b16 %v513
    %v839 = vunpack.c.l.b16 %v514
    %v840 = vunpack.c.h.b16 %v514
    %v841 = vunpack.c.l.b16 %v515
    %v842 = vunpack.c.l.b16 %v516
    %v843 = vunpack.c.h.b16 %v516
    %v844 = vunpack.c.l.b16 %v517
    %v845 = vunpack.c.l.b16 %v518
    %v846 = vunpack.c.h.b16 %v518
    %v847 = vunpack.c.l.b16 %v519
    %v848 = vpack.c.b16 %v659, %v656
    %v849 = vpack.c.b16 %v660, %v657
    %v850 = vpack.c.b16 %v661, %v658
    %v851 = vpack.c.b16 %v665, %v662
    %v852 = vpack.c.b16 %v666, %v663
    %v853 = vpack.c.b16 %v667, %v664
    %v854 = vpack.c.b16 %v671, %v668
    %v855 = vpack.c.b16 %v672, %v669
    %v856 = vpack.c.b16 %v673, %v670
    %v857 = vpack.c.b16 %v677, %v674
    %v858 = vpack.c.b16 %v678, %v675
    %v859 = vpack.c.b16 %v679, %v676
    %v860 = vpack.c.b16 %v683, %v680
    %v861 = vpack.c.b16 %v684, %v681
    %v862 = vpack.c.b16 %v685, %v682
    %v863 = vpack.c.b16 %v689, %v686
    %v864 = vpack.c.b16 %v690, %v687
    %v865 = vpack.c.b16 %v691, %v688
    %v866 = vpack.c.b16 %v695, %v692
    %v867 = vpack.c.b16 %v696, %v693
    %v868 = vpack.c.b16 %v697, %v694
    %v869 = vpack.c.b16 %v701, %v698
    %v870 = vpack.c.b16 %v702, %v699
    %v871 = vpack.c.b16 %v703, %v700
    %v872 = vpack.c.b16 %v707, %v704
    %v873 = vpack.c.b16 %v708, %v705
    %v874 = vpack.c.b16 %v709, %v706
    %v875 = vpack.c.b16 %v713, %v710
    %v876 = vpack.c.b16 %v714, %v711
    %v877 = vpack.c.b16 %v715, %v712
    %v878 = vpack.c.b16 %v719, %v716
    %v879 = vpack.c.b16 %v720, %v717
    %v880 = vpack.c.b16 %v721, %v718
    %v881 = vpack.c.b16 %v725, %v722
    %v882 = vpack.c.b16 %v726, %v723
    %v883 = vpack.c.b16 %v727, %v724
    %v884 = vpack.c.b16 %v731, %v728
    %v885 = vpack.c.b16 %v732, %v729
    %v886 = vpack.c.b16 %v733, %v730
    %v887 = vpack.c.b16 %v737, %v734
    %v888 = vpack.c.b16 %v738, %v735
    %v889 = vpack.c.b16 %v739, %v736
    %v890 = vpack.c.b16 %v743, %v740
    %v891 = vpack.c.b16 %v744, %v741
    %v892 = vpack.c.b16 %v745, %v742
    %v893 = vpack.c.b16 %v749, %v746
    %v894 = vpack.c.b16 %v750, %v747
    %v895 = vpack.c.b16 %v751, %v748
    %v896 = vpack.c.b16 %v755, %v752
    %v897 = vpack.c.b16 %v756, %v753
    %v898 = vpack.c.b16 %v757, %v754
    %v899 = vpack.c.b16 %v761, %v758
    %v900 = vpack.c.b16 %v762, %v759
    %v901 = vpack.c.b16 %v763, %v760
    %v902 = vpack.c.b16 %v767, %v764
    %v903 = vpack.c.b16 %v768, %v765
    %v904 = vpack.c.b16 %v769, %v766
    %v905 = vpack.c.b16 %v773, %v770
    %v906 = vpack.c.b16 %v774, %v771
    %v907 = vpack.c.b16 %v775, %v772
    %v908 = vpack.c.b16 %v779, %v776
    %v909 = vpack.c.b16 %v780, %v777
    %v910 = vpack.c.b16 %v781, %v778
    %v911 = vpack.c.b16 %v785, %v782
    %v912 = vpack.c.b16 %v786, %v783
    %v913 = vpack.c.b16 %v787, %v784
    %v914 = vpack.c.b16 %v791, %v788
    %v915 = vpack.c.b16 %v792, %v789
    %v916 = vpack.c.b16 %v793, %v790
    %v917 = vpack.c.b16 %v797, %v794
    %v918 = vpack.c.b16 %v798, %v795
    %v919 = vpack.c.b16 %v799, %v796
    %v920 = vpack.c.b16 %v803, %v800
    %v921 = vpack.c.b16 %v804, %v801
    %v922 = vpack.c.b16 %v805, %v802
    %v923 = vpack.c.b16 %v809, %v806
    %v924 = vpack.c.b16 %v810, %v807
    %v925 = vpack.c.b16 %v811, %v808
    %v926 = vpack.c.b16 %v815, %v812
    %v927 = vpack.c.b16 %v816, %v813
    %v928 = vpack.c.b16 %v817, %v814
    %v929 = vpack.c.b16 %v821, %v818
    %v930 = vpack.c.b16 %v822, %v819
    %v931 = vpack.c.b16 %v823, %v820
    %v932 = vpack.c.b16 %v827, %v824
    %v933 = vpack.c.b16 %v828, %v825
    %v934 = vpack.c.b16 %v829, %v826
    %v935 = vpack.c.b16 %v833, %v830
    %v936 = vpack.c.b16 %v834, %v831
    %v937 = vpack.c.b16 %v835, %v832
    %v938 = vpack.c.b16 %v839, %v836
    %v939 = vpack.c.b16 %v840, %v837
    %v940 = vpack.c.b16 %v841, %v838
    %v941 = vpack.c.b16 %v845, %v842
    %v942 = vpack.c.b16 %v846, %v843
    %v943 = vpack.c.b16 %v847, %v844
    %1040 = vmatpush.bf16.msra.mxu0 %v869
    %1041 = vmatpush.bf16.msra.mxu0 %v866
    %1042 = vmatpush.bf16.msra.mxu0 %v863
    %1043 = vmatpush.bf16.msra.mxu0 %v860
    %1044 = vmatpush.bf16.msra.mxu0 %v857
    %1045 = vmatpush.bf16.msra.mxu0 %v854
    %1046 = vmatpush.bf16.msra.mxu0 %v851
    %1047 = vmatpush.bf16.msra.mxu0 %v848
    %1048 = vmatmul.bf16.gmra.mxu0 %v388
    %v1049 = vpop.f32.mrf.mxu0
    %v1050 = vadd.f32 %v522, %v1049
    %v1051 = vpop.f32.mrf.mxu0
    %v1052 = vadd.f32 %v522, %v1051
    %1053 = vdwg.mxu0
    %1054 = vmatpush.bf16.msra.mxu0 %v893
    %1055 = vmatpush.bf16.msra.mxu0 %v890
    %1056 = vmatpush.bf16.msra.mxu0 %v887
    %1057 = vmatpush.bf16.msra.mxu0 %v884
    %1058 = vmatpush.bf16.msra.mxu0 %v881
    %1059 = vmatpush.bf16.msra.mxu0 %v878
    %1060 = vmatpush.bf16.msra.mxu0 %v875
    %1061 = vmatpush.bf16.msra.mxu0 %v872
    %1062 = vmatmul.bf16.gmra.mxu0 %v389
    %v1063 = vpop.f32.mrf.mxu0
    %v1064 = vadd.f32 %v1050, %v1063
    %v1065 = vpop.f32.mrf.mxu0
    %v1066 = vadd.f32 %v1052, %v1065
    %1067 = vdwg.mxu0
    %1068 = vmatpush.bf16.msra.mxu0 %v917
    %1069 = vmatpush.bf16.msra.mxu0 %v914
    %1070 = vmatpush.bf16.msra.mxu0 %v911
    %1071 = vmatpush.bf16.msra.mxu0 %v908
    %1072 = vmatpush.bf16.msra.mxu0 %v905
    %1073 = vmatpush.bf16.msra.mxu0 %v902
    %1074 = vmatpush.bf16.msra.mxu0 %v899
    %1075 = vmatpush.bf16.msra.mxu0 %v896
    %1076 = vmatmul.bf16.gmra.mxu0 %v390
    %v1077 = vpop.f32.mrf.mxu0
    %v1078 = vadd.f32 %v1064, %v1077
    %v1079 = vpop.f32.mrf.mxu0
    %v1080 = vadd.f32 %v1066, %v1079
    %1081 = vdwg.mxu0
    %1082 = vmatpush.bf16.msra.mxu0 %v941
    %1083 = vmatpush.bf16.msra.mxu0 %v938
    %1084 = vmatpush.bf16.msra.mxu0 %v935
    %1085 = vmatpush.bf16.msra.mxu0 %v932
    %1086 = vmatpush.bf16.msra.mxu0 %v929
    %1087 = vmatpush.bf16.msra.mxu0 %v926
    %1088 = vmatpush.bf16.msra.mxu0 %v923
    %1089 = vmatpush.bf16.msra.mxu0 %v920
    %1090 = vmatmul.bf16.gmra.mxu0 %v391
    %v1091 = vpop.f32.mrf.mxu0
    %v1092 = vadd.f32 %v1078, %v1091
    %v1093 = vpop.f32.mrf.mxu0
    %v1094 = vadd.f32 %v1080, %v1093
    %1095 = vdwg.mxu0
    %1096 = vmatpush.bf16.msra.mxu0 %v870
    %1097 = vmatpush.bf16.msra.mxu0 %v867
    %1098 = vmatpush.bf16.msra.mxu0 %v864
    %1099 = vmatpush.bf16.msra.mxu0 %v861
    %1100 = vmatpush.bf16.msra.mxu0 %v858
    %1101 = vmatpush.bf16.msra.mxu0 %v855
    %1102 = vmatpush.bf16.msra.mxu0 %v852
    %1103 = vmatpush.bf16.msra.mxu0 %v849
    %1104 = vmatmul.bf16.gmra.mxu0 %v388
    %v1105 = vpop.f32.mrf.mxu0
    %v1106 = vadd.f32 %v523, %v1105
    %v1107 = vpop.f32.mrf.mxu0
    %v1108 = vadd.f32 %v523, %v1107
    %1109 = vdwg.mxu0
    %1110 = vmatpush.bf16.msra.mxu0 %v894
    %1111 = vmatpush.bf16.msra.mxu0 %v891
    %1112 = vmatpush.bf16.msra.mxu0 %v888
    %1113 = vmatpush.bf16.msra.mxu0 %v885
    %1114 = vmatpush.bf16.msra.mxu0 %v882
    %1115 = vmatpush.bf16.msra.mxu0 %v879
    %1116 = vmatpush.bf16.msra.mxu0 %v876
    %1117 = vmatpush.bf16.msra.mxu0 %v873
    %1118 = vmatmul.bf16.gmra.mxu0 %v389
    %v1119 = vpop.f32.mrf.mxu0
    %v1120 = vadd.f32 %v1106, %v1119
    %v1121 = vpop.f32.mrf.mxu0
    %v1122 = vadd.f32 %v1108, %v1121
    %1123 = vdwg.mxu0
    %1124 = vmatpush.bf16.msra.mxu0 %v918
    %1125 = vmatpush.bf16.msra.mxu0 %v915
    %1126 = vmatpush.bf16.msra.mxu0 %v912
    %1127 = vmatpush.bf16.msra.mxu0 %v909
    %1128 = vmatpush.bf16.msra.mxu0 %v906
    %1129 = vmatpush.bf16.msra.mxu0 %v903
    %1130 = vmatpush.bf16.msra.mxu0 %v900
    %1131 = vmatpush.bf16.msra.mxu0 %v897
    %1132 = vmatmul.bf16.gmra.mxu0 %v390
    %v1133 = vpop.f32.mrf.mxu0
    %v1134 = vadd.f32 %v1120, %v1133
    %v1135 = vpop.f32.mrf.mxu0
    %v1136 = vadd.f32 %v1122, %v1135
    %1137 = vdwg.mxu0
    %1138 = vmatpush.bf16.msra.mxu0 %v942
    %1139 = vmatpush.bf16.msra.mxu0 %v939
    %1140 = vmatpush.bf16.msra.mxu0 %v936
    %1141 = vmatpush.bf16.msra.mxu0 %v933
    %1142 = vmatpush.bf16.msra.mxu0 %v930
    %1143 = vmatpush.bf16.msra.mxu0 %v927
    %1144 = vmatpush.bf16.msra.mxu0 %v924
    %1145 = vmatpush.bf16.msra.mxu0 %v921
    %1146 = vmatmul.bf16.gmra.mxu0 %v391
    %v1147 = vpop.f32.mrf.mxu0
    %v1148 = vadd.f32 %v1134, %v1147
    %v1149 = vpop.f32.mrf.mxu0
    %v1150 = vadd.f32 %v1136, %v1149
    %1151 = vdwg.mxu0
    %1152 = vmatpush.bf16.msra.mxu0 %v871
    %1153 = vmatpush.bf16.msra.mxu0 %v868
    %1154 = vmatpush.bf16.msra.mxu0 %v865
    %1155 = vmatpush.bf16.msra.mxu0 %v862
    %1156 = vmatpush.bf16.msra.mxu0 %v859
    %1157 = vmatpush.bf16.msra.mxu0 %v856
    %1158 = vmatpush.bf16.msra.mxu0 %v853
    %1159 = vmatpush.bf16.msra.mxu0 %v850
    %1160 = vmatmul.bf16.gmra.mxu0 %v388
    %v1161 = vpop.f32.mrf.mxu0
    %v1162 = vadd.f32 %v524, %v1161
    %v1163 = vpop.f32.mrf.mxu0
    %v1164 = vadd.f32 %v524, %v1163
    %1165 = vdwg.mxu0
    %1166 = vmatpush.bf16.msra.mxu0 %v895
    %1167 = vmatpush.bf16.msra.mxu0 %v892
    %1168 = vmatpush.bf16.msra.mxu0 %v889
    %1169 = vmatpush.bf16.msra.mxu0 %v886
    %1170 = vmatpush.bf16.msra.mxu0 %v883
    %1171 = vmatpush.bf16.msra.mxu0 %v880
    %1172 = vmatpush.bf16.msra.mxu0 %v877
    %1173 = vmatpush.bf16.msra.mxu0 %v874
    %1174 = vmatmul.bf16.gmra.mxu0 %v389
    %v1175 = vpop.f32.mrf.mxu0
    %v1176 = vadd.f32 %v1162, %v1175
    %v1177 = vpop.f32.mrf.mxu0
    %v1178 = vadd.f32 %v1164, %v1177
    %1179 = vdwg.mxu0
    %1180 = vmatpush.bf16.msra.mxu0 %v919
    %1181 = vmatpush.bf16.msra.mxu0 %v916
    %1182 = vmatpush.bf16.msra.mxu0 %v913
    %1183 = vmatpush.bf16.msra.mxu0 %v910
    %1184 = vmatpush.bf16.msra.mxu0 %v907
    %1185 = vmatpush.bf16.msra.mxu0 %v904
    %1186 = vmatpush.bf16.msra.mxu0 %v901
    %1187 = vmatpush.bf16.msra.mxu0 %v898
    %1188 = vmatmul.bf16.gmra.mxu0 %v390
    %v1189 = vpop.f32.mrf.mxu0
    %v1190 = vadd.f32 %v1176, %v1189
    %v1191 = vpop.f32.mrf.mxu0
    %v1192 = vadd.f32 %v1178, %v1191
    %1193 = vdwg.mxu0
    %1194 = vmatpush.bf16.msra.mxu0 %v943
    %1195 = vmatpush.bf16.msra.mxu0 %v940
    %1196 = vmatpush.bf16.msra.mxu0 %v937
    %1197 = vmatpush.bf16.msra.mxu0 %v934
    %1198 = vmatpush.bf16.msra.mxu0 %v931
    %1199 = vmatpush.bf16.msra.mxu0 %v928
    %1200 = vmatpush.bf16.msra.mxu0 %v925
    %1201 = vmatpush.bf16.msra.mxu0 %v922
    %1202 = vmatmul.bf16.gmra.mxu0 %v391
    %v1203 = vpop.f32.mrf.mxu0
    %v1204 = vadd.f32 %v1190, %v1203
    %v1205 = vpop.f32.mrf.mxu0
    %v1206 = vadd.f32 %v1192, %v1205
    %1207 = vdwg.mxu0
    %v1208 = vmax.f32 %v1092, 0.0
    %v1209 = vmax.f32 %v1148, 0.0
    %v1210 = vmax.f32 %v1204, 0.0
    %v1211 = vmax.f32 %v1094, 0.0
    %v1212 = vmax.f32 %v1150, 0.0
    %v1213 = vmax.f32 %v1206, 0.0
    %v1214 = vpack.c.bf16 %v384, %v376
    %v1215 = vpack.c.bf16 %v385, %v377
    %v1216 = vpack.c.bf16 %v386, %v378
    %v1217 = vpack.c.bf16 %v387, %v379
    %v1218 = vld [vmem:[#allocation9] sm:$0xff]
    %v1219 = vld [vmem:[#allocation9 + $0x8] sm:$0xf]
    %v1220 = vld [vmem:[#allocation9 + $0xc] sm:$0xff]
    %v1221 = vld [vmem:[#allocation9 + $0x14] sm:$0xf]
    %v1222 = vld [vmem:[#allocation9 + $0x18] sm:$0xff]
    %v1223 = vld [vmem:[#allocation9 + $0x20] sm:$0xf]
    %v1224 = vld [vmem:[#allocation9 + $0x24] sm:$0xff]
    %v1225 = vld [vmem:[#allocation9 + $0x2c] sm:$0xf]
    %v1226 = vld [vmem:[#allocation9 + $0x30] sm:$0xff]
    %v1227 = vld [vmem:[#allocation9 + $0x38] sm:$0xf]
    %v1228 = vld [vmem:[#allocation9 + $0x3c] sm:$0xff]
    %v1229 = vld [vmem:[#allocation9 + $0x44] sm:$0xf]
    %v1230 = vld [vmem:[#allocation9 + $0x48] sm:$0xff]
    %v1231 = vld [vmem:[#allocation9 + $0x50] sm:$0xf]
    %v1232 = vld [vmem:[#allocation9 + $0x54] sm:$0xff]
    %v1233 = vld [vmem:[#allocation9 + $0x5c] sm:$0xf]
    %v1234 = vld [vmem:[#allocation9 + $0x60] sm:$0xff]
    %v1235 = vld [vmem:[#allocation9 + $0x68] sm:$0xf]
    %v1236 = vld [vmem:[#allocation9 + $0x6c] sm:$0xff]
    %v1237 = vld [vmem:[#allocation9 + $0x74] sm:$0xf]
    %v1238 = vld [vmem:[#allocation9 + $0x78] sm:$0xff]
    %v1239 = vld [vmem:[#allocation9 + $0x80] sm:$0xf]
    %v1240 = vld [vmem:[#allocation9 + $0x84] sm:$0xff]
    %v1241 = vld [vmem:[#allocation9 + $0x8c] sm:$0xf]
    %v1242 = vld [vmem:[#allocation9 + $0x90] sm:$0xff]
    %v1243 = vld [vmem:[#allocation9 + $0x98] sm:$0xf]
    %v1244 = vld [vmem:[#allocation9 + $0x9c] sm:$0xff]
    %v1245 = vld [vmem:[#allocation9 + $0xa4] sm:$0xf]
    %v1246 = vld [vmem:[#allocation9 + $0xa8] sm:$0xff]
    %v1247 = vld [vmem:[#allocation9 + $0xb0] sm:$0xf]
    %v1248 = vld [vmem:[#allocation9 + $0xb4] sm:$0xff]
    %v1249 = vld [vmem:[#allocation9 + $0xbc] sm:$0xf]
    %v1250 = vld [vmem:[#allocation9 + $0xc0] sm:$0xff]
    %v1251 = vld [vmem:[#allocation9 + $0xc8] sm:$0xf]
    %v1252 = vld [vmem:[#allocation9 + $0xcc] sm:$0xff]
    %v1253 = vld [vmem:[#allocation9 + $0xd4] sm:$0xf]
    %v1254 = vld [vmem:[#allocation9 + $0xd8] sm:$0xff]
    %v1255 = vld [vmem:[#allocation9 + $0xe0] sm:$0xf]
    %v1256 = vld [vmem:[#allocation9 + $0xe4] sm:$0xff]
    %v1257 = vld [vmem:[#allocation9 + $0xec] sm:$0xf]
    %v1258 = vld [vmem:[#allocation9 + $0xf0] sm:$0xff]
    %v1259 = vld [vmem:[#allocation9 + $0xf8] sm:$0xf]
    %v1260 = vld [vmem:[#allocation9 + $0xfc] sm:$0xff]
    %v1261 = vld [vmem:[#allocation9 + $0x104] sm:$0xf]
    %v1262 = vld [vmem:[#allocation9 + $0x108] sm:$0xff]
    %v1263 = vld [vmem:[#allocation9 + $0x110] sm:$0xf]
    %v1264 = vld [vmem:[#allocation9 + $0x114] sm:$0xff]
    %v1265 = vld [vmem:[#allocation9 + $0x11c] sm:$0xf]
    %v1266 = vld [vmem:[#allocation9 + $0x120] sm:$0xff]
    %v1267 = vld [vmem:[#allocation9 + $0x128] sm:$0xf]
    %v1268 = vld [vmem:[#allocation9 + $0x12c] sm:$0xff]
    %v1269 = vld [vmem:[#allocation9 + $0x134] sm:$0xf]
    %v1270 = vld [vmem:[#allocation9 + $0x138] sm:$0xff]
    %v1271 = vld [vmem:[#allocation9 + $0x140] sm:$0xf]
    %v1272 = vld [vmem:[#allocation9 + $0x144] sm:$0xff]
    %v1273 = vld [vmem:[#allocation9 + $0x14c] sm:$0xf]
    %v1274 = vld [vmem:[#allocation9 + $0x150] sm:$0xff]
    %v1275 = vld [vmem:[#allocation9 + $0x158] sm:$0xf]
    %v1276 = vld [vmem:[#allocation9 + $0x15c] sm:$0xff]
    %v1277 = vld [vmem:[#allocation9 + $0x164] sm:$0xf]
    %v1278 = vld [vmem:[#allocation9 + $0x168] sm:$0xff]
    %v1279 = vld [vmem:[#allocation9 + $0x170] sm:$0xf]
    %v1280 = vld [vmem:[#allocation9 + $0x174] sm:$0xff]
    %v1281 = vld [vmem:[#allocation9 + $0x17c] sm:$0xf]
    %v1282 = vld [vmem:[#allocation9 + $0x180] sm:$0xff]
    %v1283 = vld [vmem:[#allocation9 + $0x188] sm:$0xf]
    %v1284 = vld [vmem:[#allocation9 + $0x18c] sm:$0xff]
    %v1285 = vld [vmem:[#allocation9 + $0x194] sm:$0xf]
    %v1286 = vld [vmem:[#allocation9 + $0x198] sm:$0xff]
    %v1287 = vld [vmem:[#allocation9 + $0x1a0] sm:$0xf]
    %v1288 = vld [vmem:[#allocation9 + $0x1a4] sm:$0xff]
    %v1289 = vld [vmem:[#allocation9 + $0x1ac] sm:$0xf]
    %v1290 = vld [vmem:[#allocation9 + $0x1b0] sm:$0xff]
    %v1291 = vld [vmem:[#allocation9 + $0x1b8] sm:$0xf]
    %v1292 = vld [vmem:[#allocation9 + $0x1bc] sm:$0xff]
    %v1293 = vld [vmem:[#allocation9 + $0x1c4] sm:$0xf]
    %v1294 = vld [vmem:[#allocation9 + $0x1c8] sm:$0xff]
    %v1295 = vld [vmem:[#allocation9 + $0x1d0] sm:$0xf]
    %v1296 = vld [vmem:[#allocation9 + $0x1d4] sm:$0xff]
    %v1297 = vld [vmem:[#allocation9 + $0x1dc] sm:$0xf]
    %v1298 = vld [vmem:[#allocation9 + $0x1e0] sm:$0xff]
    %v1299 = vld [vmem:[#allocation9 + $0x1e8] sm:$0xf]
    %v1300 = vld [vmem:[#allocation9 + $0x1ec] sm:$0xff]
    %v1301 = vld [vmem:[#allocation9 + $0x1f4] sm:$0xf]
    %v1302 = vld [vmem:[#allocation9 + $0x1f8] sm:$0xff]
    %v1303 = vld [vmem:[#allocation9 + $0x200] sm:$0xf]
    %v1304 = vld [vmem:[#allocation9 + $0x204] sm:$0xff]
    %v1305 = vld [vmem:[#allocation9 + $0x20c] sm:$0xf]
    %v1306 = vld [vmem:[#allocation9 + $0x210] sm:$0xff]
    %v1307 = vld [vmem:[#allocation9 + $0x218] sm:$0xf]
    %v1308 = vld [vmem:[#allocation9 + $0x21c] sm:$0xff]
    %v1309 = vld [vmem:[#allocation9 + $0x224] sm:$0xf]
    %v1310 = vld [vmem:[#allocation9 + $0x228] sm:$0xff]
    %v1311 = vld [vmem:[#allocation9 + $0x230] sm:$0xf]
    %v1312 = vld [vmem:[#allocation9 + $0x234] sm:$0xff]
    %v1313 = vld [vmem:[#allocation9 + $0x23c] sm:$0xf]
    %v1314 = vld [vmem:[#allocation9 + $0x240] sm:$0xff]
    %v1315 = vld [vmem:[#allocation9 + $0x248] sm:$0xf]
    %v1316 = vld [vmem:[#allocation9 + $0x24c] sm:$0xff]
    %v1317 = vld [vmem:[#allocation9 + $0x254] sm:$0xf]
    %v1318 = vld [vmem:[#allocation9 + $0x258] sm:$0xff]
    %v1319 = vld [vmem:[#allocation9 + $0x260] sm:$0xf]
    %v1320 = vld [vmem:[#allocation9 + $0x264] sm:$0xff]
    %v1321 = vld [vmem:[#allocation9 + $0x26c] sm:$0xf]
    %v1322 = vld [vmem:[#allocation9 + $0x270] sm:$0xff]
    %v1323 = vld [vmem:[#allocation9 + $0x278] sm:$0xf]
    %v1324 = vld [vmem:[#allocation9 + $0x27c] sm:$0xff]
    %v1325 = vld [vmem:[#allocation9 + $0x284] sm:$0xf]
    %v1326 = vld [vmem:[#allocation9 + $0x288] sm:$0xff]
    %v1327 = vld [vmem:[#allocation9 + $0x290] sm:$0xf]
    %v1328 = vld [vmem:[#allocation9 + $0x294] sm:$0xff]
    %v1329 = vld [vmem:[#allocation9 + $0x29c] sm:$0xf]
    %v1330 = vld [vmem:[#allocation9 + $0x2a0] sm:$0xff]
    %v1331 = vld [vmem:[#allocation9 + $0x2a8] sm:$0xf]
    %v1332 = vld [vmem:[#allocation9 + $0x2ac] sm:$0xff]
    %v1333 = vld [vmem:[#allocation9 + $0x2b4] sm:$0xf]
    %v1334 = vld [vmem:[#allocation9 + $0x2b8] sm:$0xff]
    %v1335 = vld [vmem:[#allocation9 + $0x2c0] sm:$0xf]
    %v1336 = vld [vmem:[#allocation9 + $0x2c4] sm:$0xff]
    %v1337 = vld [vmem:[#allocation9 + $0x2cc] sm:$0xf]
    %v1338 = vld [vmem:[#allocation9 + $0x2d0] sm:$0xff]
    %v1339 = vld [vmem:[#allocation9 + $0x2d8] sm:$0xf]
    %v1340 = vld [vmem:[#allocation9 + $0x2dc] sm:$0xff]
    %v1341 = vld [vmem:[#allocation9 + $0x2e4] sm:$0xf]
    %v1342 = vld [vmem:[#allocation9 + $0x2e8] sm:$0xff]
    %v1343 = vld [vmem:[#allocation9 + $0x2f0] sm:$0xf]
    %v1344 = vld [vmem:[#allocation9 + $0x2f4] sm:$0xff]
    %v1345 = vld [vmem:[#allocation9 + $0x2fc] sm:$0xf]
    %v1346 = vld [vmem:[#allocation10] sm:$0x7]
    %v1348 = vperm.slane %v1346, 0
    %v1349 = vperm.slane %v1346, 1
    %v1350 = vperm.slane %v1346, 2
    %v1482 = vunpack.c.l.b16 %v1218
    %v1483 = vunpack.c.h.b16 %v1218
    %v1484 = vunpack.c.l.b16 %v1219
    %v1485 = vunpack.c.l.b16 %v1220
    %v1486 = vunpack.c.h.b16 %v1220
    %v1487 = vunpack.c.l.b16 %v1221
    %v1488 = vunpack.c.l.b16 %v1222
    %v1489 = vunpack.c.h.b16 %v1222
    %v1490 = vunpack.c.l.b16 %v1223
    %v1491 = vunpack.c.l.b16 %v1224
    %v1492 = vunpack.c.h.b16 %v1224
    %v1493 = vunpack.c.l.b16 %v1225
    %v1494 = vunpack.c.l.b16 %v1226
    %v1495 = vunpack.c.h.b16 %v1226
    %v1496 = vunpack.c.l.b16 %v1227
    %v1497 = vunpack.c.l.b16 %v1228
    %v1498 = vunpack.c.h.b16 %v1228
    %v1499 = vunpack.c.l.b16 %v1229
    %v1500 = vunpack.c.l.b16 %v1230
    %v1501 = vunpack.c.h.b16 %v1230
    %v1502 = vunpack.c.l.b16 %v1231
    %v1503 = vunpack.c.l.b16 %v1232
    %v1504 = vunpack.c.h.b16 %v1232
    %v1505 = vunpack.c.l.b16 %v1233
    %v1506 = vunpack.c.l.b16 %v1234
    %v1507 = vunpack.c.h.b16 %v1234
    %v1508 = vunpack.c.l.b16 %v1235
    %v1509 = vunpack.c.l.b16 %v1236
    %v1510 = vunpack.c.h.b16 %v1236
    %v1511 = vunpack.c.l.b16 %v1237
    %v1512 = vunpack.c.l.b16 %v1238
    %v1513 = vunpack.c.h.b16 %v1238
    %v1514 = vunpack.c.l.b16 %v1239
    %v1515 = vunpack.c.l.b16 %v1240
    %v1516 = vunpack.c.h.b16 %v1240
    %v1517 = vunpack.c.l.b16 %v1241
    %v1518 = vunpack.c.l.b16 %v1242
    %v1519 = vunpack.c.h.b16 %v1242
    %v1520 = vunpack.c.l.b16 %v1243
    %v1521 = vunpack.c.l.b16 %v1244
    %v1522 = vunpack.c.h.b16 %v1244
    %v1523 = vunpack.c.l.b16 %v1245
    %v1524 = vunpack.c.l.b16 %v1246
    %v1525 = vunpack.c.h.b16 %v1246
    %v1526 = vunpack.c.l.b16 %v1247
    %v1527 = vunpack.c.l.b16 %v1248
    %v1528 = vunpack.c.h.b16 %v1248
    %v1529 = vunpack.c.l.b16 %v1249
    %v1530 = vunpack.c.l.b16 %v1250
    %v1531 = vunpack.c.h.b16 %v1250
    %v1532 = vunpack.c.l.b16 %v1251
    %v1533 = vunpack.c.l.b16 %v1252
    %v1534 = vunpack.c.h.b16 %v1252
    %v1535 = vunpack.c.l.b16 %v1253
    %v1536 = vunpack.c.l.b16 %v1254
    %v1537 = vunpack.c.h.b16 %v1254
    %v1538 = vunpack.c.l.b16 %v1255
    %v1539 = vunpack.c.l.b16 %v1256
    %v1540 = vunpack.c.h.b16 %v1256
    %v1541 = vunpack.c.l.b16 %v1257
    %v1542 = vunpack.c.l.b16 %v1258
    %v1543 = vunpack.c.h.b16 %v1258
    %v1544 = vunpack.c.l.b16 %v1259
    %v1545 = vunpack.c.l.b16 %v1260
    %v1546 = vunpack.c.h.b16 %v1260
    %v1547 = vunpack.c.l.b16 %v1261
    %v1548 = vunpack.c.l.b16 %v1262
    %v1549 = vunpack.c.h.b16 %v1262
    %v1550 = vunpack.c.l.b16 %v1263
    %v1551 = vunpack.c.l.b16 %v1264
    %v1552 = vunpack.c.h.b16 %v1264
    %v1553 = vunpack.c.l.b16 %v1265
    %v1554 = vunpack.c.l.b16 %v1266
    %v1555 = vunpack.c.h.b16 %v1266
    %v1556 = vunpack.c.l.b16 %v1267
    %v1557 = vunpack.c.l.b16 %v1268
    %v1558 = vunpack.c.h.b16 %v1268
    %v1559 = vunpack.c.l.b16 %v1269
    %v1560 = vunpack.c.l.b16 %v1270
    %v1561 = vunpack.c.h.b16 %v1270
    %v1562 = vunpack.c.l.b16 %v1271
    %v1563 = vunpack.c.l.b16 %v1272
    %v1564 = vunpack.c.h.b16 %v1272
    %v1565 = vunpack.c.l.b16 %v1273
    %v1566 = vunpack.c.l.b16 %v1274
    %v1567 = vunpack.c.h.b16 %v1274
    %v1568 = vunpack.c.l.b16 %v1275
    %v1569 = vunpack.c.l.b16 %v1276
    %v1570 = vunpack.c.h.b16 %v1276
    %v1571 = vunpack.c.l.b16 %v1277
    %v1572 = vunpack.c.l.b16 %v1278
    %v1573 = vunpack.c.h.b16 %v1278
    %v1574 = vunpack.c.l.b16 %v1279
    %v1575 = vunpack.c.l.b16 %v1280
    %v1576 = vunpack.c.h.b16 %v1280
    %v1577 = vunpack.c.l.b16 %v1281
    %v1578 = vunpack.c.l.b16 %v1282
    %v1579 = vunpack.c.h.b16 %v1282
    %v1580 = vunpack.c.l.b16 %v1283
    %v1581 = vunpack.c.l.b16 %v1284
    %v1582 = vunpack.c.h.b16 %v1284
    %v1583 = vunpack.c.l.b16 %v1285
    %v1584 = vunpack.c.l.b16 %v1286
    %v1585 = vunpack.c.h.b16 %v1286
    %v1586 = vunpack.c.l.b16 %v1287
    %v1587 = vunpack.c.l.b16 %v1288
    %v1588 = vunpack.c.h.b16 %v1288
    %v1589 = vunpack.c.l.b16 %v1289
    %v1590 = vunpack.c.l.b16 %v1290
    %v1591 = vunpack.c.h.b16 %v1290
    %v1592 = vunpack.c.l.b16 %v1291
    %v1593 = vunpack.c.l.b16 %v1292
    %v1594 = vunpack.c.h.b16 %v1292
    %v1595 = vunpack.c.l.b16 %v1293
    %v1596 = vunpack.c.l.b16 %v1294
    %v1597 = vunpack.c.h.b16 %v1294
    %v1598 = vunpack.c.l.b16 %v1295
    %v1599 = vunpack.c.l.b16 %v1296
    %v1600 = vunpack.c.h.b16 %v1296
    %v1601 = vunpack.c.l.b16 %v1297
    %v1602 = vunpack.c.l.b16 %v1298
    %v1603 = vunpack.c.h.b16 %v1298
    %v1604 = vunpack.c.l.b16 %v1299
    %v1605 = vunpack.c.l.b16 %v1300
    %v1606 = vunpack.c.h.b16 %v1300
    %v1607 = vunpack.c.l.b16 %v1301
    %v1608 = vunpack.c.l.b16 %v1302
    %v1609 = vunpack.c.h.b16 %v1302
    %v1610 = vunpack.c.l.b16 %v1303
    %v1611 = vunpack.c.l.b16 %v1304
    %v1612 = vunpack.c.h.b16 %v1304
    %v1613 = vunpack.c.l.b16 %v1305
    %v1614 = vunpack.c.l.b16 %v1306
    %v1615 = vunpack.c.h.b16 %v1306
    %v1616 = vunpack.c.l.b16 %v1307
    %v1617 = vunpack.c.l.b16 %v1308
    %v1618 = vunpack.c.h.b16 %v1308
    %v1619 = vunpack.c.l.b16 %v1309
    %v1620 = vunpack.c.l.b16 %v1310
    %v1621 = vunpack.c.h.b16 %v1310
    %v1622 = vunpack.c.l.b16 %v1311
    %v1623 = vunpack.c.l.b16 %v1312
    %v1624 = vunpack.c.h.b16 %v1312
    %v1625 = vunpack.c.l.b16 %v1313
    %v1626 = vunpack.c.l.b16 %v1314
    %v1627 = vunpack.c.h.b16 %v1314
    %v1628 = vunpack.c.l.b16 %v1315
    %v1629 = vunpack.c.l.b16 %v1316
    %v1630 = vunpack.c.h.b16 %v1316
    %v1631 = vunpack.c.l.b16 %v1317
    %v1632 = vunpack.c.l.b16 %v1318
    %v1633 = vunpack.c.h.b16 %v1318
    %v1634 = vunpack.c.l.b16 %v1319
    %v1635 = vunpack.c.l.b16 %v1320
    %v1636 = vunpack.c.h.b16 %v1320
    %v1637 = vunpack.c.l.b16 %v1321
    %v1638 = vunpack.c.l.b16 %v1322
    %v1639 = vunpack.c.h.b16 %v1322
    %v1640 = vunpack.c.l.b16 %v1323
    %v1641 = vunpack.c.l.b16 %v1324
    %v1642 = vunpack.c.h.b16 %v1324
    %v1643 = vunpack.c.l.b16 %v1325
    %v1644 = vunpack.c.l.b16 %v1326
    %v1645 = vunpack.c.h.b16 %v1326
    %v1646 = vunpack.c.l.b16 %v1327
    %v1647 = vunpack.c.l.b16 %v1328
    %v1648 = vunpack.c.h.b16 %v1328
    %v1649 = vunpack.c.l.b16 %v1329
    %v1650 = vunpack.c.l.b16 %v1330
    %v1651 = vunpack.c.h.b16 %v1330
    %v1652 = vunpack.c.l.b16 %v1331
    %v1653 = vunpack.c.l.b16 %v1332
    %v1654 = vunpack.c.h.b16 %v1332
    %v1655 = vunpack.c.l.b16 %v1333
    %v1656 = vunpack.c.l.b16 %v1334
    %v1657 = vunpack.c.h.b16 %v1334
    %v1658 = vunpack.c.l.b16 %v1335
    %v1659 = vunpack.c.l.b16 %v1336
    %v1660 = vunpack.c.h.b16 %v1336
    %v1661 = vunpack.c.l.b16 %v1337
    %v1662 = vunpack.c.l.b16 %v1338
    %v1663 = vunpack.c.h.b16 %v1338
    %v1664 = vunpack.c.l.b16 %v1339
    %v1665 = vunpack.c.l.b16 %v1340
    %v1666 = vunpack.c.h.b16 %v1340
    %v1667 = vunpack.c.l.b16 %v1341
    %v1668 = vunpack.c.l.b16 %v1342
    %v1669 = vunpack.c.h.b16 %v1342
    %v1670 = vunpack.c.l.b16 %v1343
    %v1671 = vunpack.c.l.b16 %v1344
    %v1672 = vunpack.c.h.b16 %v1344
    %v1673 = vunpack.c.l.b16 %v1345
    %v1674 = vpack.c.b16 %v1485, %v1482
    %v1675 = vpack.c.b16 %v1486, %v1483
    %v1676 = vpack.c.b16 %v1487, %v1484
    %v1677 = vpack.c.b16 %v1491, %v1488
    %v1678 = vpack.c.b16 %v1492, %v1489
    %v1679 = vpack.c.b16 %v1493, %v1490
    %v1680 = vpack.c.b16 %v1497, %v1494
    %v1681 = vpack.c.b16 %v1498, %v1495
    %v1682 = vpack.c.b16 %v1499, %v1496
    %v1683 = vpack.c.b16 %v1503, %v1500
    %v1684 = vpack.c.b16 %v1504, %v1501
    %v1685 = vpack.c.b16 %v1505, %v1502
    %v1686 = vpack.c.b16 %v1509, %v1506
    %v1687 = vpack.c.b16 %v1510, %v1507
    %v1688 = vpack.c.b16 %v1511, %v1508
    %v1689 = vpack.c.b16 %v1515, %v1512
    %v1690 = vpack.c.b16 %v1516, %v1513
    %v1691 = vpack.c.b16 %v1517, %v1514
    %v1692 = vpack.c.b16 %v1521, %v1518
    %v1693 = vpack.c.b16 %v1522, %v1519
    %v1694 = vpack.c.b16 %v1523, %v1520
    %v1695 = vpack.c.b16 %v1527, %v1524
    %v1696 = vpack.c.b16 %v1528, %v1525
    %v1697 = vpack.c.b16 %v1529, %v1526
    %v1698 = vpack.c.b16 %v1533, %v1530
    %v1699 = vpack.c.b16 %v1534, %v1531
    %v1700 = vpack.c.b16 %v1535, %v1532
    %v1701 = vpack.c.b16 %v1539, %v1536
    %v1702 = vpack.c.b16 %v1540, %v1537
    %v1703 = vpack.c.b16 %v1541, %v1538
    %v1704 = vpack.c.b16 %v1545, %v1542
    %v1705 = vpack.c.b16 %v1546, %v1543
    %v1706 = vpack.c.b16 %v1547, %v1544
    %v1707 = vpack.c.b16 %v1551, %v1548
    %v1708 = vpack.c.b16 %v1552, %v1549
    %v1709 = vpack.c.b16 %v1553, %v1550
    %v1710 = vpack.c.b16 %v1557, %v1554
    %v1711 = vpack.c.b16 %v1558, %v1555
    %v1712 = vpack.c.b16 %v1559, %v1556
    %v1713 = vpack.c.b16 %v1563, %v1560
    %v1714 = vpack.c.b16 %v1564, %v1561
    %v1715 = vpack.c.b16 %v1565, %v1562
    %v1716 = vpack.c.b16 %v1569, %v1566
    %v1717 = vpack.c.b16 %v1570, %v1567
    %v1718 = vpack.c.b16 %v1571, %v1568
    %v1719 = vpack.c.b16 %v1575, %v1572
    %v1720 = vpack.c.b16 %v1576, %v1573
    %v1721 = vpack.c.b16 %v1577, %v1574
    %v1722 = vpack.c.b16 %v1581, %v1578
    %v1723 = vpack.c.b16 %v1582, %v1579
    %v1724 = vpack.c.b16 %v1583, %v1580
    %v1725 = vpack.c.b16 %v1587, %v1584
    %v1726 = vpack.c.b16 %v1588, %v1585
    %v1727 = vpack.c.b16 %v1589, %v1586
    %v1728 = vpack.c.b16 %v1593, %v1590
    %v1729 = vpack.c.b16 %v1594, %v1591
    %v1730 = vpack.c.b16 %v1595, %v1592
    %v1731 = vpack.c.b16 %v1599, %v1596
    %v1732 = vpack.c.b16 %v1600, %v1597
    %v1733 = vpack.c.b16 %v1601, %v1598
    %v1734 = vpack.c.b16 %v1605, %v1602
    %v1735 = vpack.c.b16 %v1606, %v1603
    %v1736 = vpack.c.b16 %v1607, %v1604
    %v1737 = vpack.c.b16 %v1611, %v1608
    %v1738 = vpack.c.b16 %v1612, %v1609
    %v1739 = vpack.c.b16 %v1613, %v1610
    %v1740 = vpack.c.b16 %v1617, %v1614
    %v1741 = vpack.c.b16 %v1618, %v1615
    %v1742 = vpack.c.b16 %v1619, %v1616
    %v1743 = vpack.c.b16 %v1623, %v1620
    %v1744 = vpack.c.b16 %v1624, %v1621
    %v1745 = vpack.c.b16 %v1625, %v1622
    %v1746 = vpack.c.b16 %v1629, %v1626
    %v1747 = vpack.c.b16 %v1630, %v1627
    %v1748 = vpack.c.b16 %v1631, %v1628
    %v1749 = vpack.c.b16 %v1635, %v1632
    %v1750 = vpack.c.b16 %v1636, %v1633
    %v1751 = vpack.c.b16 %v1637, %v1634
    %v1752 = vpack.c.b16 %v1641, %v1638
    %v1753 = vpack.c.b16 %v1642, %v1639
    %v1754 = vpack.c.b16 %v1643, %v1640
    %v1755 = vpack.c.b16 %v1647, %v1644
    %v1756 = vpack.c.b16 %v1648, %v1645
    %v1757 = vpack.c.b16 %v1649, %v1646
    %v1758 = vpack.c.b16 %v1653, %v1650
    %v1759 = vpack.c.b16 %v1654, %v1651
    %v1760 = vpack.c.b16 %v1655, %v1652
    %v1761 = vpack.c.b16 %v1659, %v1656
    %v1762 = vpack.c.b16 %v1660, %v1657
    %v1763 = vpack.c.b16 %v1661, %v1658
    %v1764 = vpack.c.b16 %v1665, %v1662
    %v1765 = vpack.c.b16 %v1666, %v1663
    %v1766 = vpack.c.b16 %v1667, %v1664
    %v1767 = vpack.c.b16 %v1671, %v1668
    %v1768 = vpack.c.b16 %v1672, %v1669
    %v1769 = vpack.c.b16 %v1673, %v1670
    %1866 = vmatpush.bf16.msra.mxu0 %v1695
    %1867 = vmatpush.bf16.msra.mxu0 %v1692
    %1868 = vmatpush.bf16.msra.mxu0 %v1689
    %1869 = vmatpush.bf16.msra.mxu0 %v1686
    %1870 = vmatpush.bf16.msra.mxu0 %v1683
    %1871 = vmatpush.bf16.msra.mxu0 %v1680
    %1872 = vmatpush.bf16.msra.mxu0 %v1677
    %1873 = vmatpush.bf16.msra.mxu0 %v1674
    %1874 = vmatmul.bf16.gmra.mxu0 %v1214
    %v1875 = vpop.f32.mrf.mxu0
    %v1876 = vadd.f32 %v1348, %v1875
    %v1877 = vpop.f32.mrf.mxu0
    %v1878 = vadd.f32 %v1348, %v1877
    %1879 = vdwg.mxu0
    %1880 = vmatpush.bf16.msra.mxu0 %v1719
    %1881 = vmatpush.bf16.msra.mxu0 %v1716
    %1882 = vmatpush.bf16.msra.mxu0 %v1713
    %1883 = vmatpush.bf16.msra.mxu0 %v1710
    %1884 = vmatpush.bf16.msra.mxu0 %v1707
    %1885 = vmatpush.bf16.msra.mxu0 %v1704
    %1886 = vmatpush.bf16.msra.mxu0 %v1701
    %1887 = vmatpush.bf16.msra.mxu0 %v1698
    %1888 = vmatmul.bf16.gmra.mxu0 %v1215
    %v1889 = vpop.f32.mrf.mxu0
    %v1890 = vadd.f32 %v1876, %v1889
    %v1891 = vpop.f32.mrf.mxu0
    %v1892 = vadd.f32 %v1878, %v1891
    %1893 = vdwg.mxu0
    %1894 = vmatpush.bf16.msra.mxu0 %v1743
    %1895 = vmatpush.bf16.msra.mxu0 %v1740
    %1896 = vmatpush.bf16.msra.mxu0 %v1737
    %1897 = vmatpush.bf16.msra.mxu0 %v1734
    %1898 = vmatpush.bf16.msra.mxu0 %v1731
    %1899 = vmatpush.bf16.msra.mxu0 %v1728
    %1900 = vmatpush.bf16.msra.mxu0 %v1725
    %1901 = vmatpush.bf16.msra.mxu0 %v1722
    %1902 = vmatmul.bf16.gmra.mxu0 %v1216
    %v1903 = vpop.f32.mrf.mxu0
    %v1904 = vadd.f32 %v1890, %v1903
    %v1905 = vpop.f32.mrf.mxu0
    %v1906 = vadd.f32 %v1892, %v1905
    %1907 = vdwg.mxu0
    %1908 = vmatpush.bf16.msra.mxu0 %v1767
    %1909 = vmatpush.bf16.msra.mxu0 %v1764
    %1910 = vmatpush.bf16.msra.mxu0 %v1761
    %1911 = vmatpush.bf16.msra.mxu0 %v1758
    %1912 = vmatpush.bf16.msra.mxu0 %v1755
    %1913 = vmatpush.bf16.msra.mxu0 %v1752
    %1914 = vmatpush.bf16.msra.mxu0 %v1749
    %1915 = vmatpush.bf16.msra.mxu0 %v1746
    %1916 = vmatmul.bf16.gmra.mxu0 %v1217
    %v1917 = vpop.f32.mrf.mxu0
    %v1918 = vadd.f32 %v1904, %v1917
    %v1919 = vpop.f32.mrf.mxu0
    %v1920 = vadd.f32 %v1906, %v1919
    %1921 = vdwg.mxu0
    %1922 = vmatpush.bf16.msra.mxu0 %v1696
    %1923 = vmatpush.bf16.msra.mxu0 %v1693
    %1924 = vmatpush.bf16.msra.mxu0 %v1690
    %1925 = vmatpush.bf16.msra.mxu0 %v1687
    %1926 = vmatpush.bf16.msra.mxu0 %v1684
    %1927 = vmatpush.bf16.msra.mxu0 %v1681
    %1928 = vmatpush.bf16.msra.mxu0 %v1678
    %1929 = vmatpush.bf16.msra.mxu0 %v1675
    %1930 = vmatmul.bf16.gmra.mxu0 %v1214
    %v1931 = vpop.f32.mrf.mxu0
    %v1932 = vadd.f32 %v1349, %v1931
    %v1933 = vpop.f32.mrf.mxu0
    %v1934 = vadd.f32 %v1349, %v1933
    %1935 = vdwg.mxu0
    %1936 = vmatpush.bf16.msra.mxu0 %v1720
    %1937 = vmatpush.bf16.msra.mxu0 %v1717
    %1938 = vmatpush.bf16.msra.mxu0 %v1714
    %1939 = vmatpush.bf16.msra.mxu0 %v1711
    %1940 = vmatpush.bf16.msra.mxu0 %v1708
    %1941 = vmatpush.bf16.msra.mxu0 %v1705
    %1942 = vmatpush.bf16.msra.mxu0 %v1702
    %1943 = vmatpush.bf16.msra.mxu0 %v1699
    %1944 = vmatmul.bf16.gmra.mxu0 %v1215
    %v1945 = vpop.f32.mrf.mxu0
    %v1946 = vadd.f32 %v1932, %v1945
    %v1947 = vpop.f32.mrf.mxu0
    %v1948 = vadd.f32 %v1934, %v1947
    %1949 = vdwg.mxu0
    %1950 = vmatpush.bf16.msra.mxu0 %v1744
    %1951 = vmatpush.bf16.msra.mxu0 %v1741
    %1952 = vmatpush.bf16.msra.mxu0 %v1738
    %1953 = vmatpush.bf16.msra.mxu0 %v1735
    %1954 = vmatpush.bf16.msra.mxu0 %v1732
    %1955 = vmatpush.bf16.msra.mxu0 %v1729
    %1956 = vmatpush.bf16.msra.mxu0 %v1726
    %1957 = vmatpush.bf16.msra.mxu0 %v1723
    %1958 = vmatmul.bf16.gmra.mxu0 %v1216
    %v1959 = vpop.f32.mrf.mxu0
    %v1960 = vadd.f32 %v1946, %v1959
    %v1961 = vpop.f32.mrf.mxu0
    %v1962 = vadd.f32 %v1948, %v1961
    %1963 = vdwg.mxu0
    %1964 = vmatpush.bf16.msra.mxu0 %v1768
    %1965 = vmatpush.bf16.msra.mxu0 %v1765
    %1966 = vmatpush.bf16.msra.mxu0 %v1762
    %1967 = vmatpush.bf16.msra.mxu0 %v1759
    %1968 = vmatpush.bf16.msra.mxu0 %v1756
    %1969 = vmatpush.bf16.msra.mxu0 %v1753
    %1970 = vmatpush.bf16.msra.mxu0 %v1750
    %1971 = vmatpush.bf16.msra.mxu0 %v1747
    %1972 = vmatmul.bf16.gmra.mxu0 %v1217
    %v1973 = vpop.f32.mrf.mxu0
    %v1974 = vadd.f32 %v1960, %v1973
    %v1975 = vpop.f32.mrf.mxu0
    %v1976 = vadd.f32 %v1962, %v1975
    %1977 = vdwg.mxu0
    %1978 = vmatpush.bf16.msra.mxu0 %v1697
    %1979 = vmatpush.bf16.msra.mxu0 %v1694
    %1980 = vmatpush.bf16.msra.mxu0 %v1691
    %1981 = vmatpush.bf16.msra.mxu0 %v1688
    %1982 = vmatpush.bf16.msra.mxu0 %v1685
    %1983 = vmatpush.bf16.msra.mxu0 %v1682
    %1984 = vmatpush.bf16.msra.mxu0 %v1679
    %1985 = vmatpush.bf16.msra.mxu0 %v1676
    %1986 = vmatmul.bf16.gmra.mxu0 %v1214
    %v1987 = vpop.f32.mrf.mxu0
    %v1988 = vadd.f32 %v1350, %v1987
    %v1989 = vpop.f32.mrf.mxu0
    %v1990 = vadd.f32 %v1350, %v1989
    %1991 = vdwg.mxu0
    %1992 = vmatpush.bf16.msra.mxu0 %v1721
    %1993 = vmatpush.bf16.msra.mxu0 %v1718
    %1994 = vmatpush.bf16.msra.mxu0 %v1715
    %1995 = vmatpush.bf16.msra.mxu0 %v1712
    %1996 = vmatpush.bf16.msra.mxu0 %v1709
    %1997 = vmatpush.bf16.msra.mxu0 %v1706
    %1998 = vmatpush.bf16.msra.mxu0 %v1703
    %1999 = vmatpush.bf16.msra.mxu0 %v1700
    %2000 = vmatmul.bf16.gmra.mxu0 %v1215
    %v2001 = vpop.f32.mrf.mxu0
    %v2002 = vadd.f32 %v1988, %v2001
    %v2003 = vpop.f32.mrf.mxu0
    %v2004 = vadd.f32 %v1990, %v2003
    %2005 = vdwg.mxu0
    %2006 = vmatpush.bf16.msra.mxu0 %v1745
    %2007 = vmatpush.bf16.msra.mxu0 %v1742
    %2008 = vmatpush.bf16.msra.mxu0 %v1739
    %2009 = vmatpush.bf16.msra.mxu0 %v1736
    %2010 = vmatpush.bf16.msra.mxu0 %v1733
    %2011 = vmatpush.bf16.msra.mxu0 %v1730
    %2012 = vmatpush.bf16.msra.mxu0 %v1727
    %2013 = vmatpush.bf16.msra.mxu0 %v1724
    %2014 = vmatmul.bf16.gmra.mxu0 %v1216
    %v2015 = vpop.f32.mrf.mxu0
    %v2016 = vadd.f32 %v2002, %v2015
    %v2017 = vpop.f32.mrf.mxu0
    %v2018 = vadd.f32 %v2004, %v2017
    %2019 = vdwg.mxu0
    %2020 = vmatpush.bf16.msra.mxu0 %v1769
    %2021 = vmatpush.bf16.msra.mxu0 %v1766
    %2022 = vmatpush.bf16.msra.mxu0 %v1763
    %2023 = vmatpush.bf16.msra.mxu0 %v1760
    %2024 = vmatpush.bf16.msra.mxu0 %v1757
    %2025 = vmatpush.bf16.msra.mxu0 %v1754
    %2026 = vmatpush.bf16.msra.mxu0 %v1751
    %2027 = vmatpush.bf16.msra.mxu0 %v1748
    %2028 = vmatmul.bf16.gmra.mxu0 %v1217
    %v2029 = vpop.f32.mrf.mxu0
    %v2030 = vadd.f32 %v2016, %v2029
    %v2031 = vpop.f32.mrf.mxu0
    %v2032 = vadd.f32 %v2018, %v2031
    %2033 = vdwg.mxu0
    %v2034 = vmax.f32 %v1918, 0.0
    %v2035 = vmax.f32 %v1974, 0.0
    %v2036 = vmax.f32 %v2030, 0.0
    %v2037 = vmax.f32 %v1920, 0.0
    %v2038 = vmax.f32 %v1976, 0.0
    %v2039 = vmax.f32 %v2032, 0.0
    %v2040 = vld [vmem:[%s7] sm:$0x7]
    %v2041 = vunpack.c.l.bf16 %v2040
    %v2043 = vperm.slane %v2041, 0
    %v2044 = vperm.slane %v2041, 2
    %v2045 = vperm.slane %v2041, 4
    %v2049 = vperm.slane %v2043, 0
    %v2050 = vperm.slane %v2044, 0
    %v2051 = vperm.slane %v2045, 0
    %v2052 = vmul.f32 %v1208, %v2049
    %v2053 = vmul.f32 %v1209, %v2050
    %v2054 = vmul.f32 %v1210, %v2051
    %v2055 = vmul.f32 %v1211, %v2049
    %v2056 = vmul.f32 %v1212, %v2050
    %v2057 = vmul.f32 %v1213, %v2051
    %v2058 = vadd.f32 %v2052, %v2053
    %v2059 = vadd.f32 %v2058, %v2054
    %2060 = vadd.xlane.f32.xlu0 %v2059
    %v2061 = vpop.xlane.xlu0 %2060
    %v2062 = vadd.f32 %v2055, %v2056
    %v2063 = vadd.f32 %v2062, %v2057
    %2064 = vadd.xlane.f32.xlu0 %v2063
    %v2065 = vpop.xlane.xlu0 %2064
    %v2066 = vld [vmem:[#allocation12] sm:$0x7]
    %v2067 = vunpack.c.l.bf16 %v2066
    %v2069 = vperm.slane %v2067, 0
    %v2070 = vperm.slane %v2067, 2
    %v2071 = vperm.slane %v2067, 4
    %v2075 = vperm.slane %v2069, 0
    %v2076 = vperm.slane %v2070, 0
    %v2077 = vperm.slane %v2071, 0
    %v2078 = vmul.f32 %v2034, %v2075
    %v2079 = vmul.f32 %v2035, %v2076
    %v2080 = vmul.f32 %v2036, %v2077
    %v2081 = vmul.f32 %v2037, %v2075
    %v2082 = vmul.f32 %v2038, %v2076
    %v2083 = vmul.f32 %v2039, %v2077
    %v2084 = vadd.f32 %v2078, %v2079
    %v2085 = vadd.f32 %v2084, %v2080
    %2086 = vadd.xlane.f32.xlu0 %v2085
    %v2087 = vpop.xlane.xlu0 %2086
    %v2088 = vadd.f32 %v2081, %v2082
    %v2089 = vadd.f32 %v2088, %v2083
    %2090 = vadd.xlane.f32.xlu0 %v2089
    %v2091 = vpop.xlane.xlu0 %2090
    %vm2092 = vcmask 7168
    %v2093 = vsel %vm2092, %v2061, %v2087
    %v2094 = vsel %vm2092, %v2065, %v2091
    %v2095 = vld [vmem:[%s9] sm:$0x1]
    %v2097 = vperm.slane %v2095, 0
    %v2099 = vadd.f32 %v2093, %v2097
    %v2100 = vadd.f32 %v2094, %v2097
    %vm2101 = vcmask 15360
    %2102 = vst.msk [vmem:[%s10] sm:$0xff] %vm2101, %v2099
    %2103 = vst.msk [vmem:[%s10 + $0x8] sm:$0xff] %vm2101, %v2100
    // Predicated region
    $region70: #{tpu_custom_call.1} parent=1 // pred_check
      _
    $region71: #{tpu_custom_call.1} parent=1 // pred_check_branch
      %2105 = sbr.rel (0) target = $region73
    $region72: #{tpu_custom_call.1} parent=1 // pred_region
      _
    $region73: #{tpu_custom_call.1} parent=1 // pred_fallthru
      _
    // Predicated region
    $region74: #{tpu_custom_call.1} parent=1 // pred_check
      _
    $region75: #{tpu_custom_call.1} parent=1 // pred_check_branch
      %2107 = sbr.rel (0) target = $region77
    $region76: #{tpu_custom_call.1} parent=1 // pred_region
      _
    $region77: #{tpu_custom_call.1} parent=1 // pred_fallthru
      _
    %2108 = vsyncpa [#allocation3], 1
    %2109 = vsyncpa [#allocation5], 1
    %2110 = vsyncpa [#allocation8], 1
    %2111 = vsyncpa [#allocation11], 1

</llo_original>
